<compile_context>
chip_gen: v6e
topology: v6e:2x2x1
jax: 0.10.0
libtpu: 0.0.40
codegen_flags: <defaults>
</compile_context>

<pallas_src>
import jax
import jax.numpy as jnp
import numpy as np
from jax.experimental import pallas as pl
from jax.experimental.pallas import tpu as pltpu

# ---- static configuration (consistent with the module defaults) --------------
N, C, H, W = 2, 4, 16, 16          # input image (N, C, H, W)
V = H * W                          # number of tokens
DIM = H * W                        # self.dim = H*W (softmax scale and head in-dim)
DEPTH = 2                          # number of diffusion/attention steps
NUM_CLASSES = 10
TAU = 1.0                          # tau (method 'A': X <- tau*A(XW) + X)
QCHUNK = 128                       # query (lane) chunk for the softmax/value stage


def transformer_kernel(x_ref, wcat_ref, lw_ref, lb_ref, out_ref):
    """Processes its (nb, C, V) block fully in the transposed, lane-dense layout."""
    nb = x_ref.shape[0]                        # static block batch (1 or N)
    Wcat = wcat_ref[...]                       # (2C, C) = [M4^T ; WV^T]
    ones_row = jnp.ones((1, V), jnp.float32)   # hoisted: becomes the MXU denom row

    rows = []
    for b in range(nb):                        # static unroll: independent batch ILP
        XT = x_ref[b]                          # (C, V), lane-dense
        # weight sharing: same packed weights reused every step
        for _ in range(DEPTH):
            # fused projection: rows 0..C-1 -> (X @ M4)^T, rows C..2C-1 -> (X @ WV)^T
            proj = jnp.dot(Wcat, XT, preferred_element_type=jnp.float32)     # (2C, V)
            ZT = proj[0:C, :]                                                # (C, V)
            XWT = proj[C:2 * C, :]                                           # (C, V)
            # ones row appended so the value matmul also emits the softmax denominator
            # (row C of the result); bf16 operands, f32 accumulate.
            XW_aug = jnp.concatenate([XWT, ones_row], axis=0).astype(jnp.bfloat16)  # (C+1, V)

            chunks = []
            for q0 in range(0, V, QCHUNK):     # 128-lane query chunks: softmax columns
                ZT_c = ZT[:, q0:q0 + QCHUNK]   # are independent -> exact, no rescaling
                # S^T chunk: [w, v] = sum_c X^T[c, w] * Z^T[c, v]    (f32 scores)
                # NOTE: Mosaic may transpose XT for the MXU; it is recomputed per chunk
                # rather than held live across the chunk loop.
                ST = jax.lax.dot_general(XT, ZT_c, (((0,), (0,)), ((), ())),
                                         preferred_element_type=jnp.float32)  # (V, QCHUNK)
                m = jnp.max(ST, axis=0, keepdims=True)                         # (1, QCHUNK)
                PT = jnp.exp(ST - m).astype(jnp.bfloat16)                      # unnormalized P^T
                Yl = jnp.dot(XW_aug, PT, preferred_element_type=jnp.float32)   # (C+1, QCHUNK)
                inv = pl.reciprocal(Yl[C:C + 1, :], approx=True)               # EUP slot
                chunks.append(Yl[0:C, :] * inv)                                # (C, QCHUNK)
            upd = jnp.concatenate(chunks, axis=1)                              # (C, V)
            XT = (TAU * upd if TAU != 1.0 else upd) + XT                       # diffusion_step

        # classification head: mean over channels, then lane-contracted Linear
        xm = jnp.mean(XT, axis=0, keepdims=True)                               # (1, V)
        logits = jax.lax.dot_general(xm, lw_ref[...], (((1,), (1,)), ((), ())),
                                     preferred_element_type=jnp.float32)       # (1, NC)
        rows.append((logits + lb_ref[...]).reshape(1, 1, NUM_CLASSES))

    out_ref[...] = rows[0] if nb == 1 else jnp.concatenate(rows, axis=0)


def _fuse_batch_into_one_grid_step() -> bool:
    """Fuse the batch on single-TensorCore chips (v5e/v6e); on megacore / multi-TC
    parts (v4, v5p, v7x) keep grid=(N,) "parallel" so each core gets one element."""
    try:
        kind = jax.devices()[0].device_kind.lower()
    except Exception:
        return False
    return any(tag in kind for tag in ("v5e", "v5 lite", "v5litepod", "v6e", "v6 lite"))


def simple_transformer(image, WQ, WK, WV, LW, LB):
    # Plain-JAX glue: channel-major (N, C, V) layout, packed weights, no transposes
    # of the activations.
    XT = image.reshape(N, C, V).astype(jnp.float32)                           # (N, C, V)
    scale = DIM ** -0.5
    M4 = (WQ @ WK.T) * scale                                                  # (C, C)
    Wcat = jnp.concatenate([M4.T, WV.T], axis=0).astype(jnp.float32)          # (2C, C)
    LWf = LW.astype(jnp.float32)                                              # (NC, DIM) lane-dense
    lb2 = LB.reshape(1, NUM_CLASSES).astype(jnp.float32)                      # (1, NC)

    nb = N if _fuse_batch_into_one_grid_step() else 1
    grid = (N // nb,)

    out = pl.pallas_call(
        transformer_kernel,
        out_shape=jax.ShapeDtypeStruct((N, 1, NUM_CLASSES), jnp.float32),
        grid_spec=pltpu.PrefetchScalarGridSpec(
            num_scalar_prefetch=0,
            grid=grid,
            in_specs=[
                pl.BlockSpec((nb, C, V), lambda n: (n, 0, 0)),                # X^T block
                pl.BlockSpec((2 * C, C), lambda n: (0, 0)),                   # [M4^T ; WV^T]
                pl.BlockSpec((NUM_CLASSES, DIM), lambda n: (0, 0)),           # head weight (10,256)
                pl.BlockSpec((1, NUM_CLASSES), lambda n: (0, 0)),             # head bias
            ],
            out_specs=pl.BlockSpec((nb, 1, NUM_CLASSES), lambda n: (n, 0, 0)),
        ),
        compiler_params=pltpu.CompilerParams(
            # batch axis carries no cross-iteration state -> "parallel" is legal;
            # on multi-TC chips it shards N across cores, neutral on single-TC.
            dimension_semantics=("parallel",)),
    )(XT, Wcat, LWf, lb2)
    return out[:, 0, :]                                                       # (N, num_classes)


def reference(image, WQ, WK, WV, LW, LB):
    """Pure-JAX transcription of SimpleTransformer.forward for correctness check."""
    X = image.reshape(N, C, H * W).transpose(0, 2, 1)                         # (N, V, C)
    scale = DIM ** -0.5
    for _ in range(DEPTH):
        Q = X @ WQ
        K = X @ WK
        S = jnp.einsum('nvc,nwc->nvw', Q, K) * scale
        A = jax.nn.softmax(S, axis=-1)
        X = TAU * jnp.einsum('nkv,nvd->nkd', A, X @ WV) + X
    xm = X.mean(-1)                                                           # (N, V)
    return xm @ LW.T + LB


if __name__ == "__main__":
    key = jax.random.PRNGKey(0)
    k1, k2, k3, k4, k5, k6 = jax.random.split(key, 6)

    # parameter init mirroring __init__: WV ~ N(0, 10*stdev), WK/WQ ~ N(0, stdev),
    # Linear(dim, num_classes) ~ U(-1/sqrt(dim), 1/sqrt(dim))   (stdev = 1)
    WVp = 10.0 * jax.random.normal(k1, (C, C), jnp.float32)
    WKp = jax.random.normal(k2, (C, C), jnp.float32)
    WQp = jax.random.normal(k3, (C, C), jnp.float32)
    bound = 1.0 / np.sqrt(DIM)
    LWp = jax.random.uniform(k4, (NUM_CLASSES, DIM), jnp.float32, -bound, bound)
    LBp = jax.random.uniform(k5, (NUM_CLASSES,), jnp.float32, -bound, bound)

    image = jax.random.normal(k6, (N, C, H, W), jnp.float32)

    out = simple_transformer(image, WQp, WKp, WVp, LWp, LBp)
    out = jax.block_until_ready(out)

    ref = reference(image, WQp, WKp, WVp, LWp, LBp)
    rel_err = float(jnp.max(jnp.abs(out - ref)) / (jnp.max(jnp.abs(ref)) + 1e-9))
    if not np.isfinite(rel_err) or rel_err > 5e-2:
        raise RuntimeError(f"kernel/reference mismatch, rel_err={rel_err}")

    print("KERNEL_OK")
</pallas_src>

<mosaic_0001>
module attributes {stable_mosaic.version = 11 : i64} {
  func.func @transformer_kernel(%arg0: i32, %arg1: memref<1x4x256xf32, #tpu.memory_space<vmem>>, %arg2: memref<8x4xf32, #tpu.memory_space<vmem>>, %arg3: memref<10x256xf32, #tpu.memory_space<vmem>>, %arg4: memref<1x10xf32, #tpu.memory_space<vmem>>, %arg5: memref<1x1x10xf32, #tpu.memory_space<vmem>>) attributes {dimension_semantics = [#tpu.dimension_semantics<parallel>], iteration_bounds = array<i64: 2>, scalar_prefetch = 0 : i64, scratch_operands = 0 : i64, tpu.core_type = #tpu.core_type<tc>, window_params = [{transform_indices = @transform_0, window_bounds = array<i64: 1, 4, 256>}, {pipeline_mode = #tpu.pipeline_mode<synchronous>, transform_indices = @transform_1, window_bounds = array<i64: 8, 4>}, {pipeline_mode = #tpu.pipeline_mode<synchronous>, transform_indices = @transform_2, window_bounds = array<i64: 10, 256>}, {pipeline_mode = #tpu.pipeline_mode<synchronous>, transform_indices = @transform_3, window_bounds = array<i64: 1, 10>}, {transform_indices = @transform_4, window_bounds = array<i64: 1, 1, 10>}]} {
    %c0 = arith.constant 0 : index
    %c0_0 = arith.constant 0 : index
    %0 = vector.load %arg2[%c0, %c0_0] : memref<8x4xf32, #tpu.memory_space<vmem>>, vector<8x4xf32>
    %cst = arith.constant 1.000000e+00 : f32
    %1 = vector.broadcast %cst : f32 to vector<1x256xf32>
    %c0_1 = arith.constant 0 : index
    %c0_2 = arith.constant 0 : index
    %c0_3 = arith.constant 0 : index
    %2 = vector.load %arg1[%c0_1, %c0_2, %c0_3] : memref<1x4x256xf32, #tpu.memory_space<vmem>>, vector<1x4x256xf32>
    %3 = vector.shape_cast %2 : vector<1x4x256xf32> to vector<4x256xf32>
    %cst_4 = arith.constant dense<0.000000e+00> : vector<8x256xf32>
    %4 = tpu.matmul %0, %3, %cst_4 {dimension_numbers = #tpu.dot_dimension_numbers<[1], [0], [0], [1], [0, 0, 1, 1], [], []>} : vector<8x4xf32>, vector<4x256xf32>, vector<8x256xf32> -> vector<8x256xf32>
    %5 = vector.extract_strided_slice %4 {offsets = [0, 0], sizes = [4, 256], strides = [1, 1]} : vector<8x256xf32> to vector<4x256xf32>
    %6 = vector.extract_strided_slice %4 {offsets = [4, 0], sizes = [4, 256], strides = [1, 1]} : vector<8x256xf32> to vector<4x256xf32>
    %7 = tpu.concatenate %6, %1 in 0 : vector<4x256xf32>, vector<1x256xf32> -> vector<5x256xf32>
    %8 = arith.truncf %7 : vector<5x256xf32> to vector<5x256xbf16>
    %9 = vector.extract_strided_slice %5 {offsets = [0, 0], sizes = [4, 128], strides = [1, 1]} : vector<4x256xf32> to vector<4x128xf32>
    %cst_5 = arith.constant dense<0.000000e+00> : vector<256x128xf32>
    %10 = tpu.matmul %3, %9, %cst_5 {dimension_numbers = #tpu.dot_dimension_numbers<[0], [0], [1], [1], [0, 1, 1, 1], [], []>} : vector<4x256xf32>, vector<4x128xf32>, vector<256x128xf32> -> vector<256x128xf32>
    %cst_6 = arith.constant dense<0xFF800000> : vector<128xf32>
    %11 = vector.multi_reduction <maximumf>, %10, %cst_6 [0] : vector<256x128xf32> to vector<128xf32>
    %12 = vector.shape_cast %11 : vector<128xf32> to vector<1x128xf32>
    %13 = vector.broadcast %12 : vector<1x128xf32> to vector<256x128xf32>
    %14 = arith.subf %10, %13 : vector<256x128xf32>
    %15 = math.exp %14 : vector<256x128xf32>
    %16 = arith.truncf %15 : vector<256x128xf32> to vector<256x128xbf16>
    %cst_7 = arith.constant dense<0.000000e+00> : vector<5x128xf32>
    %17 = tpu.matmul %8, %16, %cst_7 {dimension_numbers = #tpu.dot_dimension_numbers<[1], [0], [0], [1], [0, 0, 1, 1], [], []>} : vector<5x256xbf16>, vector<256x128xbf16>, vector<5x128xf32> -> vector<5x128xf32>
    %18 = vector.extract_strided_slice %17 {offsets = [4, 0], sizes = [1, 128], strides = [1, 1]} : vector<5x128xf32> to vector<1x128xf32>
    %19 = tpu.reciprocal %18 {approx = true} : vector<1x128xf32> -> vector<1x128xf32>
    %20 = vector.extract_strided_slice %17 {offsets = [0, 0], sizes = [4, 128], strides = [1, 1]} : vector<5x128xf32> to vector<4x128xf32>
    %21 = vector.broadcast %19 : vector<1x128xf32> to vector<4x128xf32>
    %22 = arith.mulf %20, %21 : vector<4x128xf32>
    %23 = vector.extract_strided_slice %5 {offsets = [0, 128], sizes = [4, 128], strides = [1, 1]} : vector<4x256xf32> to vector<4x128xf32>
    %cst_8 = arith.constant dense<0.000000e+00> : vector<256x128xf32>
    %24 = tpu.matmul %3, %23, %cst_8 {dimension_numbers = #tpu.dot_dimension_numbers<[0], [0], [1], [1], [0, 1, 1, 1], [], []>} : vector<4x256xf32>, vector<4x128xf32>, vector<256x128xf32> -> vector<256x128xf32>
    %cst_9 = arith.constant dense<0xFF800000> : vector<128xf32>
    %25 = vector.multi_reduction <maximumf>, %24, %cst_9 [0] : vector<256x128xf32> to vector<128xf32>
    %26 = vector.shape_cast %25 : vector<128xf32> to vector<1x128xf32>
    %27 = vector.broadcast %26 : vector<1x128xf32> to vector<256x128xf32>
    %28 = arith.subf %24, %27 : vector<256x128xf32>
    %29 = math.exp %28 : vector<256x128xf32>
    %30 = arith.truncf %29 : vector<256x128xf32> to vector<256x128xbf16>
    %cst_10 = arith.constant dense<0.000000e+00> : vector<5x128xf32>
    %31 = tpu.matmul %8, %30, %cst_10 {dimension_numbers = #tpu.dot_dimension_numbers<[1], [0], [0], [1], [0, 0, 1, 1], [], []>} : vector<5x256xbf16>, vector<256x128xbf16>, vector<5x128xf32> -> vector<5x128xf32>
    %32 = vector.extract_strided_slice %31 {offsets = [4, 0], sizes = [1, 128], strides = [1, 1]} : vector<5x128xf32> to vector<1x128xf32>
    %33 = tpu.reciprocal %32 {approx = true} : vector<1x128xf32> -> vector<1x128xf32>
    %34 = vector.extract_strided_slice %31 {offsets = [0, 0], sizes = [4, 128], strides = [1, 1]} : vector<5x128xf32> to vector<4x128xf32>
    %35 = vector.broadcast %33 : vector<1x128xf32> to vector<4x128xf32>
    %36 = arith.mulf %34, %35 : vector<4x128xf32>
    %37 = tpu.concatenate %22, %36 in 1 : vector<4x128xf32>, vector<4x128xf32> -> vector<4x256xf32>
    %38 = arith.addf %37, %3 : vector<4x256xf32>
    %cst_11 = arith.constant dense<0.000000e+00> : vector<8x256xf32>
    %39 = tpu.matmul %0, %38, %cst_11 {dimension_numbers = #tpu.dot_dimension_numbers<[1], [0], [0], [1], [0, 0, 1, 1], [], []>} : vector<8x4xf32>, vector<4x256xf32>, vector<8x256xf32> -> vector<8x256xf32>
    %40 = vector.extract_strided_slice %39 {offsets = [0, 0], sizes = [4, 256], strides = [1, 1]} : vector<8x256xf32> to vector<4x256xf32>
    %41 = vector.extract_strided_slice %39 {offsets = [4, 0], sizes = [4, 256], strides = [1, 1]} : vector<8x256xf32> to vector<4x256xf32>
    %42 = tpu.concatenate %41, %1 in 0 : vector<4x256xf32>, vector<1x256xf32> -> vector<5x256xf32>
    %43 = arith.truncf %42 : vector<5x256xf32> to vector<5x256xbf16>
    %44 = vector.extract_strided_slice %40 {offsets = [0, 0], sizes = [4, 128], strides = [1, 1]} : vector<4x256xf32> to vector<4x128xf32>
    %cst_12 = arith.constant dense<0.000000e+00> : vector<256x128xf32>
    %45 = tpu.matmul %38, %44, %cst_12 {dimension_numbers = #tpu.dot_dimension_numbers<[0], [0], [1], [1], [0, 1, 1, 1], [], []>} : vector<4x256xf32>, vector<4x128xf32>, vector<256x128xf32> -> vector<256x128xf32>
    %cst_13 = arith.constant dense<0xFF800000> : vector<128xf32>
    %46 = vector.multi_reduction <maximumf>, %45, %cst_13 [0] : vector<256x128xf32> to vector<128xf32>
    %47 = vector.shape_cast %46 : vector<128xf32> to vector<1x128xf32>
    %48 = vector.broadcast %47 : vector<1x128xf32> to vector<256x128xf32>
    %49 = arith.subf %45, %48 : vector<256x128xf32>
    %50 = math.exp %49 : vector<256x128xf32>
    %51 = arith.truncf %50 : vector<256x128xf32> to vector<256x128xbf16>
    %cst_14 = arith.constant dense<0.000000e+00> : vector<5x128xf32>
    %52 = tpu.matmul %43, %51, %cst_14 {dimension_numbers = #tpu.dot_dimension_numbers<[1], [0], [0], [1], [0, 0, 1, 1], [], []>} : vector<5x256xbf16>, vector<256x128xbf16>, vector<5x128xf32> -> vector<5x128xf32>
    %53 = vector.extract_strided_slice %52 {offsets = [4, 0], sizes = [1, 128], strides = [1, 1]} : vector<5x128xf32> to vector<1x128xf32>
    %54 = tpu.reciprocal %53 {approx = true} : vector<1x128xf32> -> vector<1x128xf32>
    %55 = vector.extract_strided_slice %52 {offsets = [0, 0], sizes = [4, 128], strides = [1, 1]} : vector<5x128xf32> to vector<4x128xf32>
    %56 = vector.broadcast %54 : vector<1x128xf32> to vector<4x128xf32>
    %57 = arith.mulf %55, %56 : vector<4x128xf32>
    %58 = vector.extract_strided_slice %40 {offsets = [0, 128], sizes = [4, 128], strides = [1, 1]} : vector<4x256xf32> to vector<4x128xf32>
    %cst_15 = arith.constant dense<0.000000e+00> : vector<256x128xf32>
    %59 = tpu.matmul %38, %58, %cst_15 {dimension_numbers = #tpu.dot_dimension_numbers<[0], [0], [1], [1], [0, 1, 1, 1], [], []>} : vector<4x256xf32>, vector<4x128xf32>, vector<256x128xf32> -> vector<256x128xf32>
    %cst_16 = arith.constant dense<0xFF800000> : vector<128xf32>
    %60 = vector.multi_reduction <maximumf>, %59, %cst_16 [0] : vector<256x128xf32> to vector<128xf32>
    %61 = vector.shape_cast %60 : vector<128xf32> to vector<1x128xf32>
    %62 = vector.broadcast %61 : vector<1x128xf32> to vector<256x128xf32>
    %63 = arith.subf %59, %62 : vector<256x128xf32>
    %64 = math.exp %63 : vector<256x128xf32>
    %65 = arith.truncf %64 : vector<256x128xf32> to vector<256x128xbf16>
    %cst_17 = arith.constant dense<0.000000e+00> : vector<5x128xf32>
    %66 = tpu.matmul %43, %65, %cst_17 {dimension_numbers = #tpu.dot_dimension_numbers<[1], [0], [0], [1], [0, 0, 1, 1], [], []>} : vector<5x256xbf16>, vector<256x128xbf16>, vector<5x128xf32> -> vector<5x128xf32>
    %67 = vector.extract_strided_slice %66 {offsets = [4, 0], sizes = [1, 128], strides = [1, 1]} : vector<5x128xf32> to vector<1x128xf32>
    %68 = tpu.reciprocal %67 {approx = true} : vector<1x128xf32> -> vector<1x128xf32>
    %69 = vector.extract_strided_slice %66 {offsets = [0, 0], sizes = [4, 128], strides = [1, 1]} : vector<5x128xf32> to vector<4x128xf32>
    %70 = vector.broadcast %68 : vector<1x128xf32> to vector<4x128xf32>
    %71 = arith.mulf %69, %70 : vector<4x128xf32>
    %72 = tpu.concatenate %57, %71 in 1 : vector<4x128xf32>, vector<4x128xf32> -> vector<4x256xf32>
    %73 = arith.addf %72, %38 : vector<4x256xf32>
    %cst_18 = arith.constant dense<0.000000e+00> : vector<256xf32>
    %74 = vector.multi_reduction <add>, %73, %cst_18 [0] : vector<4x256xf32> to vector<256xf32>
    %75 = vector.shape_cast %74 : vector<256xf32> to vector<1x256xf32>
    %cst_19 = arith.constant 4.000000e+00 : f32
    %76 = vector.broadcast %cst_19 : f32 to vector<1x256xf32>
    %77 = arith.divf %75, %76 : vector<1x256xf32>
    %c0_20 = arith.constant 0 : index
    %c0_21 = arith.constant 0 : index
    %78 = vector.load %arg3[%c0_20, %c0_21] : memref<10x256xf32, #tpu.memory_space<vmem>>, vector<10x256xf32>
    %cst_22 = arith.constant dense<0.000000e+00> : vector<1x10xf32>
    %79 = tpu.matmul %77, %78, %cst_22 {dimension_numbers = #tpu.dot_dimension_numbers<[1], [1], [0], [0], [0, 0, 1, 0], [], []>} : vector<1x256xf32>, vector<10x256xf32>, vector<1x10xf32> -> vector<1x10xf32>
    %c0_23 = arith.constant 0 : index
    %c0_24 = arith.constant 0 : index
    %80 = vector.load %arg4[%c0_23, %c0_24] : memref<1x10xf32, #tpu.memory_space<vmem>>, vector<1x10xf32>
    %81 = arith.addf %79, %80 : vector<1x10xf32>
    %82 = vector.shape_cast %81 : vector<1x10xf32> to vector<1x1x10xf32>
    %c0_25 = arith.constant 0 : index
    %c0_26 = arith.constant 0 : index
    %c0_27 = arith.constant 0 : index
    %83 = vector.load %arg5[%c0_25, %c0_26, %c0_27] : memref<1x1x10xf32, #tpu.memory_space<vmem>>, vector<1x1x10xf32>
    tpu.vector_store %arg5[%c0_25, %c0_26, %c0_27], %82 {strides = array<i32>} : memref<1x1x10xf32, #tpu.memory_space<vmem>>, vector<1x1x10xf32>,
    return
  }
  func.func @transform_0(%arg0: i32) -> (i32, i32, i32) {
    %c0_i32 = arith.constant 0 : i32
    %c0_i32_0 = arith.constant 0 : i32
    %c0_i32_1 = arith.constant 0 : i32
    return %arg0, %c0_i32, %c0_i32_0 : i32, i32, i32
  }
  func.func @transform_1(%arg0: i32) -> (i32, i32) {
    %c0_i32 = arith.constant 0 : i32
    %c0_i32_0 = arith.constant 0 : i32
    %c0_i32_1 = arith.constant 0 : i32
    return %c0_i32, %c0_i32_0 : i32, i32
  }
  func.func @transform_2(%arg0: i32) -> (i32, i32) {
    %c0_i32 = arith.constant 0 : i32
    %c0_i32_0 = arith.constant 0 : i32
    %c0_i32_1 = arith.constant 0 : i32
    return %c0_i32, %c0_i32_0 : i32, i32
  }
  func.func @transform_3(%arg0: i32) -> (i32, i32) {
    %c0_i32 = arith.constant 0 : i32
    %c0_i32_0 = arith.constant 0 : i32
    %c0_i32_1 = arith.constant 0 : i32
    return %c0_i32, %c0_i32_0 : i32, i32
  }
  func.func @transform_4(%arg0: i32) -> (i32, i32, i32) {
    %c0_i32 = arith.constant 0 : i32
    %c0_i32_0 = arith.constant 0 : i32
    %c0_i32_1 = arith.constant 0 : i32
    return %arg0, %c0_i32, %c0_i32_0 : i32, i32, i32
  }
}

</mosaic_0001>

<llo_original>
// kernel: tpu_custom_call.1
$region0: #{tpu_custom_call.1}
  #allocation0 [shape = 'u32[]', space=smem, size = 0x4, offset = 0x4, fixed_abs, tag = 'smem constant byte address 0x4 - core index']
  #allocation1 [shape = 'u32[144,128]{1,0:T(1,128)}', space=vmem, size = 0x12000, scoped, tag = 'internal scratch']
  %s0 = inlined_call_operand.hbm [shape: f32[2,4,256], index: 0, kind: input, shape index: {}]
  %s1 = inlined_call_operand.vmem [shape: f32[8,4], index: 1, kind: input, shape index: {}]
  %s2 = inlined_call_operand.hbm [shape: f32[10,256], index: 2, kind: input, shape index: {}]
  %s3 = inlined_call_operand.vmem [shape: f32[1,10], index: 3, kind: input, shape index: {}]
  %s4 = inlined_call_operand.hbm [shape: f32[2,1,10], index: 4, kind: output, shape index: {}]
  %s5 = sld [smem:[#allocation0]]
  $region57: #{tpu_custom_call.1} parent=0
    _
  %s7 = ssub.s32 1, %s5
  %s8 = scalar_select 0, %s7, %s5
  $region1: #{tpu_custom_call.1} parent=0
    #allocation2 [shape = 'u8[8192]{0}', space=vmem, size = 0x2000, scoped, tag = 'input window, operand 0']
    #allocation3 [shape = 's32[2]{0}', space=sflag, size = 0x8, scoped, tag = 'scoped memory for tpu_custom_call.1']
    #allocation4 [shape = 's32[2]{0}', space=sflag, size = 0x8, scoped, tag = 'scoped memory for tpu_custom_call.1']
    #allocation5 [shape = 'u8[16384]{0}', space=vmem, size = 0x4000, scoped, tag = 'input window, operand 2, single buffered']
    #allocation6 [shape = 's32[1]{0}', space=sflag, size = 0x4, scoped, tag = 'scoped memory for tpu_custom_call.1']
    #allocation7 [shape = 'u8[1024]{0}', space=vmem, size = 0x400, scoped, tag = 'output window, operand 0']
    %9 = vsyncpa [#allocation3], 0
    %s10 = scalar_lea.sflag [#allocation3], 1
    %11 = vsyncpa %s10, 0
    %12 = vsyncpa [#allocation6], 0
    %13 = vsyncpa [#allocation4], 0
    %s14 = scalar_lea.sflag [#allocation4], 1
    %15 = vsyncpa %s14, 0
    loop: start=0, step=1, limit=4
    $region2: #{tpu_custom_call.1} parent=1 // loop_pre_header
      _
    $region3: #{tpu_custom_call.1} parent=1 // loop_header
      %s17 = sphi 0, %s21
      %p18 = scmp.ge.s32.totalorder %s17, 4
      %s27 = sphi 0, %s29
      %s30 = sphi 0, %s27
      %s31 = sphi 0, %s30
      %s47 = sphi 0, %s31
      %s51 = sphi 0, %s51
      %s53 = sphi 0, %s51
      %s54 = sphi 0, %s53
      %s68 = sphi 0, %s54
      %s72 = sphi 0, %s72
      %s74 = sphi 0, %s72
      %s75 = sphi 0, %s74
      %s89 = sphi 0, %s75
      %s93 = sphi 0, %s93
      %s95 = sphi 0, %s93
      %s96 = sphi 0, %s95
      %s110 = sphi 0, %s96
      %s116 = sphi 0, %s118
      %s119 = sphi 0, %s116
      %s120 = sphi 0, %s119
      %s136 = sphi 0, %s120
    $region4: #{tpu_custom_call.1} parent=1 // loop_header_branch
      %20 = sbr.rel (%p18) target = $region8
    $region5: #{tpu_custom_call.1} parent=1 // loop_body
      %s22 = ssub.s32 %s17, 1
      %s23 = ssub.s32 %s17, 2
      %s24 = sadd.s32 %s17, 1
      %s25 = ssub.s32 %s17, %s24
      %p26 = scmp.eq.s32.totalorder %s25, 0
      %s28 = sadd.s32 %s27, 1
      %s29 = scalar_select %p26, %s27, %s28
      %p32 = pneg %p26
      %p33 = scmp.eq.s32.totalorder %s17, 1
      %p34 = por %p32, %p33
      %p35 = scmp.ne.s32.totalorder %s27, %s30
      %p36 = scmp.eq.s32.totalorder %s17, 0
      %p37 = por %p35, %p36
      %p38 = scmp.ne.s32.totalorder %s27, %s30
      %p39 = scmp.eq.s32.totalorder %s22, 1
      %p40 = por %p38, %p39
      %p41 = scmp.ne.s32.totalorder %s30, %s31
      %p42 = scmp.eq.s32.totalorder %s22, 0
      %p43 = por %p41, %p42
      %p44 = scmp.ne.s32.totalorder %s30, %s31
      %p45 = scmp.eq.s32.totalorder %s23, 1
      %p46 = por %p44, %p45
      %p48 = scmp.ne.s32.totalorder %s31, %s47
      %p49 = scmp.eq.s32.totalorder %s23, 0
      %p50 = por %p48, %p49
      %s52 = sadd.s32 %s51, 1
      %p55 = scmp.eq.s32.totalorder %s17, 1
      %p56 = scmp.ne.s32.totalorder %s51, %s53
      %p57 = scmp.eq.s32.totalorder %s17, 0
      %p58 = por %p56, %p57
      %p59 = scmp.ne.s32.totalorder %s51, %s53
      %p60 = scmp.eq.s32.totalorder %s22, 1
      %p61 = por %p59, %p60
      %p62 = scmp.ne.s32.totalorder %s53, %s54
      %p63 = scmp.eq.s32.totalorder %s22, 0
      %p64 = por %p62, %p63
      %p65 = scmp.ne.s32.totalorder %s53, %s54
      %p66 = scmp.eq.s32.totalorder %s23, 1
      %p67 = por %p65, %p66
      %p69 = scmp.ne.s32.totalorder %s54, %s68
      %p70 = scmp.eq.s32.totalorder %s23, 0
      %p71 = por %p69, %p70
      %s73 = sadd.s32 %s72, 1
      %p76 = scmp.eq.s32.totalorder %s17, 1
      %p77 = scmp.ne.s32.totalorder %s72, %s74
      %p78 = scmp.eq.s32.totalorder %s17, 0
      %p79 = por %p77, %p78
      %p80 = scmp.ne.s32.totalorder %s72, %s74
      %p81 = scmp.eq.s32.totalorder %s22, 1
      %p82 = por %p80, %p81
      %p83 = scmp.ne.s32.totalorder %s74, %s75
      %p84 = scmp.eq.s32.totalorder %s22, 0
      %p85 = por %p83, %p84
      %p86 = scmp.ne.s32.totalorder %s74, %s75
      %p87 = scmp.eq.s32.totalorder %s23, 1
      %p88 = por %p86, %p87
      %p90 = scmp.ne.s32.totalorder %s75, %s89
      %p91 = scmp.eq.s32.totalorder %s23, 0
      %p92 = por %p90, %p91
      %s94 = sadd.s32 %s93, 1
      %p97 = scmp.eq.s32.totalorder %s17, 1
      %p98 = scmp.ne.s32.totalorder %s93, %s95
      %p99 = scmp.eq.s32.totalorder %s17, 0
      %p100 = por %p98, %p99
      %p101 = scmp.ne.s32.totalorder %s93, %s95
      %p102 = scmp.eq.s32.totalorder %s22, 1
      %p103 = por %p101, %p102
      %p104 = scmp.ne.s32.totalorder %s95, %s96
      %p105 = scmp.eq.s32.totalorder %s22, 0
      %p106 = por %p104, %p105
      %p107 = scmp.ne.s32.totalorder %s95, %s96
      %p108 = scmp.eq.s32.totalorder %s23, 1
      %p109 = por %p107, %p108
      %p111 = scmp.ne.s32.totalorder %s96, %s110
      %p112 = scmp.eq.s32.totalorder %s23, 0
      %p113 = por %p111, %p112
      %s114 = ssub.s32 %s17, %s24
      %p115 = scmp.eq.s32.totalorder %s114, 0
      %s117 = sadd.s32 %s116, 1
      %s118 = scalar_select %p115, %s116, %s117
      %p121 = pneg %p115
      %p122 = scmp.eq.s32.totalorder %s17, 1
      %p123 = por %p121, %p122
      %p124 = scmp.ne.s32.totalorder %s116, %s119
      %p125 = scmp.eq.s32.totalorder %s17, 0
      %p126 = por %p124, %p125
      %p127 = scmp.ne.s32.totalorder %s116, %s119
      %p128 = scmp.eq.s32.totalorder %s22, 1
      %p129 = por %p127, %p128
      %p130 = scmp.ne.s32.totalorder %s119, %s120
      %p131 = scmp.eq.s32.totalorder %s22, 0
      %p132 = por %p130, %p131
      %p133 = scmp.ne.s32.totalorder %s119, %s120
      %p134 = scmp.eq.s32.totalorder %s23, 1
      %p135 = por %p133, %p134
      %p137 = scmp.ne.s32.totalorder %s120, %s136
      %p138 = scmp.eq.s32.totalorder %s23, 0
      %p139 = por %p137, %p138
      %p140 = scmp.le.s32.totalorder 1, %s17
      %p141 = scmp.lt.s32.totalorder %s17, 3
      %p142 = pnand %p140, %p141
      %p143 = pneg %p142
      // Predicated region
      $region9: #{tpu_custom_call.1} parent=5 // pred_check
        _
      $region10: #{tpu_custom_call.1} parent=5 // pred_check_branch
        %145 = sbr.rel (%p142) target = $region12
      $region11: #{tpu_custom_call.1} parent=5 // pred_region
        %s146 = ssub.s32 %s17, 1
        // Predicated region
        $region13: #{tpu_custom_call.1} parent=11 // pred_check
          %p147 = pneg %p64
        $region14: #{tpu_custom_call.1} parent=11 // pred_check_branch
          %149 = sbr.rel (%p147) target = $region16
        $region15: #{tpu_custom_call.1} parent=11 // pred_region
          _
        $region16: #{tpu_custom_call.1} parent=11 // pred_fallthru
          _
        // Predicated region
        $region17: #{tpu_custom_call.1} parent=11 // pred_check
          %p150 = pneg %p85
        $region18: #{tpu_custom_call.1} parent=11 // pred_check_branch
          %152 = sbr.rel (%p150) target = $region20
        $region19: #{tpu_custom_call.1} parent=11 // pred_region
          %s154 = ssub.s32 512, 512
          %155 = vsyncadd [#allocation6], %s154
          %s156 = sshll.u32 [#allocation5], 4
          %s157 = int_to_ptr.vmem [resolvable:$true] %s156
          %162 = dma.hbm_to_vmem [thread:$0]  %s2, 512, %s157, [#allocation6], 256, 256, 16
        $region20: #{tpu_custom_call.1} parent=11 // pred_fallthru
          _
        // Predicated region
        $region21: #{tpu_custom_call.1} parent=11 // pred_check
          %p163 = pneg %p106
        $region22: #{tpu_custom_call.1} parent=11 // pred_check_branch
          %165 = sbr.rel (%p163) target = $region24
        $region23: #{tpu_custom_call.1} parent=11 // pred_region
          _
        $region24: #{tpu_custom_call.1} parent=11 // pred_fallthru
          _
      $region12: #{tpu_custom_call.1} parent=5 // pred_fallthru
        _
      %p166 = scmp.lt.s32.totalorder %s17, 2
      // Predicated region
      $region25: #{tpu_custom_call.1} parent=5 // pred_check
        %p167 = pneg %p166
      $region26: #{tpu_custom_call.1} parent=5 // pred_check_branch
        %169 = sbr.rel (%p167) target = $region28
      $region27: #{tpu_custom_call.1} parent=5 // pred_region
        // Predicated region
        $region29: #{tpu_custom_call.1} parent=27 // pred_check
          %p170 = pneg %p37
        $region30: #{tpu_custom_call.1} parent=27 // pred_check_branch
          %172 = sbr.rel (%p170) target = $region32
        $region31: #{tpu_custom_call.1} parent=27 // pred_region
          %s173 = sand.u32 %s27, 1
          %s174 = scalar_lea.sflag [#allocation3], %s173
          %s175 = sand.u32 %s27, 1
          %s176 = smul.addr %s175, 8
          %s177 = scalar_lea.vmem [#allocation2], %s176
          %s179 = ssub.s32 128, 128
          %180 = vsyncadd %s174, %s179
          %s181 = smul.addr %s17, 2
          %s182 = smul.addr %s181, 64
          %s183 = scalar_lea.hbm %s0, %s182
          %s185 = sshll.u32 %s177, 4
          %s186 = int_to_ptr.vmem [resolvable:$true] %s185
          %188 = dma.hbm_to_vmem [thread:$0]  %s183, 128, %s186, %s174
        $region32: #{tpu_custom_call.1} parent=27 // pred_fallthru
          _
      $region28: #{tpu_custom_call.1} parent=5 // pred_fallthru
        _
      %p189 = scmp.le.s32.totalorder 1, %s17
      %p190 = scmp.lt.s32.totalorder %s17, 3
      %p191 = pnand %p189, %p190
      %p192 = pneg %p191
      // Predicated region
      $region33: #{tpu_custom_call.1} parent=5 // pred_check
        _
      $region34: #{tpu_custom_call.1} parent=5 // pred_check_branch
        %194 = sbr.rel (%p191) target = $region36
      $region35: #{tpu_custom_call.1} parent=5 // pred_region
        %s195 = ssub.s32 %s17, 1
        %s196 = sand.u32 %s30, 1
        %s197 = scalar_lea.sflag [#allocation3], %s196
        %s198 = sand.u32 %s30, 1
        %s199 = smul.addr %s198, 8
        %s200 = scalar_lea.vmem [#allocation2], %s199
        // Predicated region
        $region37: #{tpu_custom_call.1} parent=35 // pred_check
          %p201 = pneg %p43
        $region38: #{tpu_custom_call.1} parent=35 // pred_check_branch
          %203 = sbr.rel (%p201) target = $region40
        $region39: #{tpu_custom_call.1} parent=35 // pred_region
          %204 = dma.done %s197, 128
        $region40: #{tpu_custom_call.1} parent=35 // pred_fallthru
          _
        // Predicated region
        $region41: #{tpu_custom_call.1} parent=35 // pred_check
          %p205 = pneg %p85
        $region42: #{tpu_custom_call.1} parent=35 // pred_check_branch
          %207 = sbr.rel (%p205) target = $region44
        $region43: #{tpu_custom_call.1} parent=35 // pred_region
          %208 = dma.done [#allocation6], 512
        $region44: #{tpu_custom_call.1} parent=35 // pred_fallthru
          _
        %s209 = sand.u32 %s30, 1
        %s210 = scalar_lea.sflag [#allocation3], %s209
        %s211 = sand.u32 %s30, 1
        %s212 = smul.addr %s211, 8
        %s213 = scalar_lea.vmem [#allocation2], %s212
        %p214 = pneg %p43
        %p215 = pneg %p40
        %p216 = pneg %p64
        %p217 = pneg %p61
        %p218 = pneg %p85
        %p219 = pneg %p82
        %p220 = pneg %p106
        %p221 = pneg %p103
        %p222 = pneg %p132
        %p223 = pneg %p129
        %s224 = sand.u32 %s119, 1
        %s225 = scalar_lea.sflag [#allocation4], %s224
        %s226 = sand.u32 %s119, 1
        %s227 = scalar_lea.vmem [#allocation7], %s226
        %v229 = vld [vmem:[%s1] sm:$0xff]
        %v230 = vld [vmem:[%s200] sm:$0xff]
        %v232 = vcombine.high %v230, %v230
        %vm233 = vcmask 31744
        %v235 = vsel %vm233, %v229, 0
        %vm237 = vcmask 1043456
        %v238 = vsel %vm237, %v230, 0
        %v240 = vsel %vm237, %v232, 0
        %242 = vmatprep.subr.mxu0 0.0
        %243 = vmatpush1.msra.mxu0 0.0
        %244 = vmatprep.subr.mxu0 0.0
        %245 = vmatpush1.msra.mxu0 0.0
        %246 = vmatprep.subr.mxu0 0.0
        %247 = vmatpush1.msra.mxu0 0.0
        %248 = vmatprep.subr.mxu0 0.0
        %249 = vmatpush1.msra.mxu0 0.0
        %250 = vmatprep.subr.mxu0 0.0
        %251 = vmatpush1.msra.mxu0 0.0
        %252 = vmatprep.subr.mxu0 0.0
        %253 = vmatpush1.msra.mxu0 0.0
        %254 = vmatprep.subr.mxu0 0.0
        %255 = vmatpush1.msra.mxu0 0.0
        %256 = vmatprep.subr.mxu0 0.0
        %257 = vmatpush1.msra.mxu0 0.0
        %258 = vmatprep.subr.mxu0 0.0
        %259 = vmatpush1.msra.mxu0 0.0
        %260 = vmatprep.subr.mxu0 0.0
        %261 = vmatpush1.msra.mxu0 0.0
        %262 = vmatprep.subr.mxu0 0.0
        %263 = vmatpush1.msra.mxu0 0.0
        %264 = vmatprep.subr.mxu0 0.0
        %265 = vmatpush1.msra.mxu0 0.0
        %266 = vmatprep.subr.mxu0 0.0
        %267 = vmatpush1.msra.mxu0 0.0
        %268 = vmatprep.subr.mxu0 0.0
        %269 = vmatpush1.msra.mxu0 0.0
        %270 = vmatprep.subr.mxu0 0.0
        %271 = vmatpush1.msra.mxu0 0.0
        %272 = vmatprep.subr.mxu0 %v240
        %273 = vmatpush1.msra.mxu0 %v238
        %274 = vmatprep.subr.mxu0 0.0
        %275 = vmatpush2.msra.mxu0 0.0
        %276 = vmatprep.subr.mxu0 0.0
        %277 = vmatpush2.msra.mxu0 0.0
        %278 = vmatprep.subr.mxu0 0.0
        %279 = vmatpush2.msra.mxu0 0.0
        %280 = vmatprep.subr.mxu0 0.0
        %281 = vmatpush2.msra.mxu0 0.0
        %282 = vmatprep.subr.mxu0 0.0
        %283 = vmatpush2.msra.mxu0 0.0
        %284 = vmatprep.subr.mxu0 0.0
        %285 = vmatpush2.msra.mxu0 0.0
        %286 = vmatprep.subr.mxu0 0.0
        %287 = vmatpush2.msra.mxu0 0.0
        %288 = vmatprep.subr.mxu0 0.0
        %289 = vmatpush2.msra.mxu0 0.0
        %290 = vmatprep.subr.mxu0 0.0
        %291 = vmatpush2.msra.mxu0 0.0
        %292 = vmatprep.subr.mxu0 0.0
        %293 = vmatpush2.msra.mxu0 0.0
        %294 = vmatprep.subr.mxu0 0.0
        %295 = vmatpush2.msra.mxu0 0.0
        %296 = vmatprep.subr.mxu0 0.0
        %297 = vmatpush2.msra.mxu0 0.0
        %298 = vmatprep.subr.mxu0 0.0
        %299 = vmatpush2.msra.mxu0 0.0
        %300 = vmatprep.subr.mxu0 0.0
        %301 = vmatpush2.msra.mxu0 0.0
        %302 = vmatprep.subr.mxu0 0.0
        %303 = vmatpush2.msra.mxu0 0.0
        %304 = vmatprep.subr.mxu0 0.0
        %305 = vmatpush2.msra.mxu0 0.0
        %306 = vmatprep.mubr.f32.mxu0 0.0
        %307 = vmatmul.mubr.f32.gmra.mxu0 %v235
        %v308 = vpop.f32.mrf.mxu0
        %v309 = vadd.f32 0.0, %v308
        %v310 = vpop.f32.mrf.mxu0
        %v311 = vadd.f32 0.0, %v310
        %312 = vdwg.mxu0
        %v315 = vrot.slane %v309, 4
        %v316 = vrot.slane %v311, 4
        %v319 = vsel %vm237, %v315, 1.0
        %v320 = vsel %vm237, %v316, 1.0
        %v321 = vpack.c.bf16 %v319, %v319
        %v322 = vpack.c.bf16 %v320, %v320
        %324 = vxpose.xlu0.b32.start [1/16] %v230, 128
        %325 = vxpose.xlu0.b32.cont [2/16] 0.0, 128
        %326 = vxpose.xlu0.b32.cont [3/16] 0.0, 128
        %327 = vxpose.xlu0.b32.cont [4/16] 0.0, 128
        %328 = vxpose.xlu0.b32.cont [5/16] 0.0, 128
        %329 = vxpose.xlu0.b32.cont [6/16] 0.0, 128
        %330 = vxpose.xlu0.b32.cont [7/16] 0.0, 128
        %331 = vxpose.xlu0.b32.cont [8/16] 0.0, 128
        %332 = vxpose.xlu0.b32.cont [9/16] 0.0, 128
        %333 = vxpose.xlu0.b32.cont [10/16] 0.0, 128
        %334 = vxpose.xlu0.b32.cont [11/16] 0.0, 128
        %335 = vxpose.xlu0.b32.cont [12/16] 0.0, 128
        %336 = vxpose.xlu0.b32.cont [13/16] 0.0, 128
        %337 = vxpose.xlu0.b32.cont [14/16] 0.0, 128
        %338 = vxpose.xlu0.b32.cont [15/16] 0.0, 128
        %339 = vxpose.xlu0.b32.end [16/16] 0.0, 128
        %v340 = vpop.trf.xlu0
        %v341 = vpop.trf.xlu0
        %v342 = vpop.trf.xlu0
        %v343 = vpop.trf.xlu0
        %v344 = vpop.trf.xlu0
        %v345 = vpop.trf.xlu0
        %v346 = vpop.trf.xlu0
        %v347 = vpop.trf.xlu0
        %v348 = vpop.trf.xlu0
        %v349 = vpop.trf.xlu0
        %v350 = vpop.trf.xlu0
        %v351 = vpop.trf.xlu0
        %v352 = vpop.trf.xlu0
        %v353 = vpop.trf.xlu0
        %v354 = vpop.trf.xlu0
        %v355 = vpop.trf.xlu0
        %356 = vxpose.xlu0.b32.start [1/16] %v232, 128
        %357 = vxpose.xlu0.b32.cont [2/16] 0.0, 128
        %358 = vxpose.xlu0.b32.cont [3/16] 0.0, 128
        %359 = vxpose.xlu0.b32.cont [4/16] 0.0, 128
        %360 = vxpose.xlu0.b32.cont [5/16] 0.0, 128
        %361 = vxpose.xlu0.b32.cont [6/16] 0.0, 128
        %362 = vxpose.xlu0.b32.cont [7/16] 0.0, 128
        %363 = vxpose.xlu0.b32.cont [8/16] 0.0, 128
        %364 = vxpose.xlu0.b32.cont [9/16] 0.0, 128
        %365 = vxpose.xlu0.b32.cont [10/16] 0.0, 128
        %366 = vxpose.xlu0.b32.cont [11/16] 0.0, 128
        %367 = vxpose.xlu0.b32.cont [12/16] 0.0, 128
        %368 = vxpose.xlu0.b32.cont [13/16] 0.0, 128
        %369 = vxpose.xlu0.b32.cont [14/16] 0.0, 128
        %370 = vxpose.xlu0.b32.cont [15/16] 0.0, 128
        %371 = vxpose.xlu0.b32.end [16/16] 0.0, 128
        %v372 = vpop.trf.xlu0
        %v373 = vpop.trf.xlu0
        %v374 = vpop.trf.xlu0
        %v375 = vpop.trf.xlu0
        %v376 = vpop.trf.xlu0
        %v377 = vpop.trf.xlu0
        %v378 = vpop.trf.xlu0
        %v379 = vpop.trf.xlu0
        %v380 = vpop.trf.xlu0
        %v381 = vpop.trf.xlu0
        %v382 = vpop.trf.xlu0
        %v383 = vpop.trf.xlu0
        %v384 = vpop.trf.xlu0
        %v385 = vpop.trf.xlu0
        %v386 = vpop.trf.xlu0
        %v387 = vpop.trf.xlu0
        %v389 = vsel %vm233, %v340, 0
        %v392 = vsel %vm233, %v341, 0
        %v395 = vsel %vm233, %v342, 0
        %v398 = vsel %vm233, %v343, 0
        %v401 = vsel %vm233, %v344, 0
        %v404 = vsel %vm233, %v345, 0
        %v407 = vsel %vm233, %v346, 0
        %v410 = vsel %vm233, %v347, 0
        %v413 = vsel %vm233, %v348, 0
        %v416 = vsel %vm233, %v349, 0
        %v419 = vsel %vm233, %v350, 0
        %v422 = vsel %vm233, %v351, 0
        %v425 = vsel %vm233, %v352, 0
        %v428 = vsel %vm233, %v353, 0
        %v431 = vsel %vm233, %v354, 0
        %v434 = vsel %vm233, %v355, 0
        %v437 = vsel %vm233, %v372, 0
        %v440 = vsel %vm233, %v373, 0
        %v443 = vsel %vm233, %v374, 0
        %v446 = vsel %vm233, %v375, 0
        %v449 = vsel %vm233, %v376, 0
        %v452 = vsel %vm233, %v377, 0
        %v455 = vsel %vm233, %v378, 0
        %v458 = vsel %vm233, %v379, 0
        %v461 = vsel %vm233, %v380, 0
        %v464 = vsel %vm233, %v381, 0
        %v467 = vsel %vm233, %v382, 0
        %v470 = vsel %vm233, %v383, 0
        %v473 = vsel %vm233, %v384, 0
        %v476 = vsel %vm233, %v385, 0
        %v479 = vsel %vm233, %v386, 0
        %v482 = vsel %vm233, %v387, 0
        %v484 = vsel %vm237, %v309, 0
        %486 = vmatprep.subr.mxu0 0.0
        %487 = vmatpush1.msra.mxu0 0.0
        %488 = vmatprep.subr.mxu0 0.0
        %489 = vmatpush1.msra.mxu0 0.0
        %490 = vmatprep.subr.mxu0 0.0
        %491 = vmatpush1.msra.mxu0 0.0
        %492 = vmatprep.subr.mxu0 0.0
        %493 = vmatpush1.msra.mxu0 0.0
        %494 = vmatprep.subr.mxu0 0.0
        %495 = vmatpush1.msra.mxu0 0.0
        %496 = vmatprep.subr.mxu0 0.0
        %497 = vmatpush1.msra.mxu0 0.0
        %498 = vmatprep.subr.mxu0 0.0
        %499 = vmatpush1.msra.mxu0 0.0
        %500 = vmatprep.subr.mxu0 0.0
        %501 = vmatpush1.msra.mxu0 0.0
        %502 = vmatprep.subr.mxu0 0.0
        %503 = vmatpush1.msra.mxu0 0.0
        %504 = vmatprep.subr.mxu0 0.0
        %505 = vmatpush1.msra.mxu0 0.0
        %506 = vmatprep.subr.mxu0 0.0
        %507 = vmatpush1.msra.mxu0 0.0
        %508 = vmatprep.subr.mxu0 0.0
        %509 = vmatpush1.msra.mxu0 0.0
        %510 = vmatprep.subr.mxu0 0.0
        %511 = vmatpush1.msra.mxu0 0.0
        %512 = vmatprep.subr.mxu0 0.0
        %513 = vmatpush1.msra.mxu0 0.0
        %514 = vmatprep.subr.mxu0 0.0
        %515 = vmatpush1.msra.mxu0 0.0
        %516 = vmatprep.subr.mxu0 0.0
        %517 = vmatpush1.msra.mxu0 %v484
        %518 = vmatprep.subr.mxu0 0.0
        %519 = vmatpush2.msra.mxu0 0.0
        %520 = vmatprep.subr.mxu0 0.0
        %521 = vmatpush2.msra.mxu0 0.0
        %522 = vmatprep.subr.mxu0 0.0
        %523 = vmatpush2.msra.mxu0 0.0
        %524 = vmatprep.subr.mxu0 0.0
        %525 = vmatpush2.msra.mxu0 0.0
        %526 = vmatprep.subr.mxu0 0.0
        %527 = vmatpush2.msra.mxu0 0.0
        %528 = vmatprep.subr.mxu0 0.0
        %529 = vmatpush2.msra.mxu0 0.0
        %530 = vmatprep.subr.mxu0 0.0
        %531 = vmatpush2.msra.mxu0 0.0
        %532 = vmatprep.subr.mxu0 0.0
        %533 = vmatpush2.msra.mxu0 0.0
        %534 = vmatprep.subr.mxu0 0.0
        %535 = vmatpush2.msra.mxu0 0.0
        %536 = vmatprep.subr.mxu0 0.0
        %537 = vmatpush2.msra.mxu0 0.0
        %538 = vmatprep.subr.mxu0 0.0
        %539 = vmatpush2.msra.mxu0 0.0
        %540 = vmatprep.subr.mxu0 0.0
        %541 = vmatpush2.msra.mxu0 0.0
        %542 = vmatprep.subr.mxu0 0.0
        %543 = vmatpush2.msra.mxu0 0.0
        %544 = vmatprep.subr.mxu0 0.0
        %545 = vmatpush2.msra.mxu0 0.0
        %546 = vmatprep.subr.mxu0 0.0
        %547 = vmatpush2.msra.mxu0 0.0
        %548 = vmatprep.subr.mxu0 0.0
        %549 = vmatpush2.msra.mxu0 0.0
        %550 = vmatprep.mubr.f32.mxu0 0.0
        %551 = vmatmul.mubr.f32.gmra.mxu0 %v389
        %v552 = vpop.f32.mrf.mxu0
        %v553 = vadd.f32 0.0, %v552
        %v554 = vpop.f32.mrf.mxu0
        %555 = vmatprep.mubr.f32.mxu0 0.0
        %556 = vmatmul.mubr.f32.gmra.mxu0 %v392
        %v557 = vpop.f32.mrf.mxu0
        %v558 = vadd.f32 0.0, %v557
        %v559 = vpop.f32.mrf.mxu0
        %560 = vmatprep.mubr.f32.mxu0 0.0
        %561 = vmatmul.mubr.f32.gmra.mxu0 %v395
        %v562 = vpop.f32.mrf.mxu0
        %v563 = vadd.f32 0.0, %v562
        %v564 = vpop.f32.mrf.mxu0
        %565 = vmatprep.mubr.f32.mxu0 0.0
        %566 = vmatmul.mubr.f32.gmra.mxu0 %v398
        %v567 = vpop.f32.mrf.mxu0
        %v568 = vadd.f32 0.0, %v567
        %v569 = vpop.f32.mrf.mxu0
        %570 = vmatprep.mubr.f32.mxu0 0.0
        %571 = vmatmul.mubr.f32.gmra.mxu0 %v401
        %v572 = vpop.f32.mrf.mxu0
        %v573 = vadd.f32 0.0, %v572
        %v574 = vpop.f32.mrf.mxu0
        %575 = vmatprep.mubr.f32.mxu0 0.0
        %576 = vmatmul.mubr.f32.gmra.mxu0 %v404
        %v577 = vpop.f32.mrf.mxu0
        %v578 = vadd.f32 0.0, %v577
        %v579 = vpop.f32.mrf.mxu0
        %580 = vmatprep.mubr.f32.mxu0 0.0
        %581 = vmatmul.mubr.f32.gmra.mxu0 %v407
        %v582 = vpop.f32.mrf.mxu0
        %v583 = vadd.f32 0.0, %v582
        %v584 = vpop.f32.mrf.mxu0
        %585 = vmatprep.mubr.f32.mxu0 0.0
        %586 = vmatmul.mubr.f32.gmra.mxu0 %v410
        %v587 = vpop.f32.mrf.mxu0
        %v588 = vadd.f32 0.0, %v587
        %v589 = vpop.f32.mrf.mxu0
        %590 = vmatprep.mubr.f32.mxu0 0.0
        %591 = vmatmul.mubr.f32.gmra.mxu0 %v413
        %v592 = vpop.f32.mrf.mxu0
        %v593 = vadd.f32 0.0, %v592
        %v594 = vpop.f32.mrf.mxu0
        %595 = vmatprep.mubr.f32.mxu0 0.0
        %596 = vmatmul.mubr.f32.gmra.mxu0 %v416
        %v597 = vpop.f32.mrf.mxu0
        %v598 = vadd.f32 0.0, %v597
        %v599 = vpop.f32.mrf.mxu0
        %600 = vmatprep.mubr.f32.mxu0 0.0
        %601 = vmatmul.mubr.f32.gmra.mxu0 %v419
        %v602 = vpop.f32.mrf.mxu0
        %v603 = vadd.f32 0.0, %v602
        %v604 = vpop.f32.mrf.mxu0
        %605 = vmatprep.mubr.f32.mxu0 0.0
        %606 = vmatmul.mubr.f32.gmra.mxu0 %v422
        %v607 = vpop.f32.mrf.mxu0
        %v608 = vadd.f32 0.0, %v607
        %v609 = vpop.f32.mrf.mxu0
        %610 = vmatprep.mubr.f32.mxu0 0.0
        %611 = vmatmul.mubr.f32.gmra.mxu0 %v425
        %v612 = vpop.f32.mrf.mxu0
        %v613 = vadd.f32 0.0, %v612
        %v614 = vpop.f32.mrf.mxu0
        %615 = vmatprep.mubr.f32.mxu0 0.0
        %616 = vmatmul.mubr.f32.gmra.mxu0 %v428
        %v617 = vpop.f32.mrf.mxu0
        %v618 = vadd.f32 0.0, %v617
        %v619 = vpop.f32.mrf.mxu0
        %620 = vmatprep.mubr.f32.mxu0 0.0
        %621 = vmatmul.mubr.f32.gmra.mxu0 %v431
        %v622 = vpop.f32.mrf.mxu0
        %v623 = vadd.f32 0.0, %v622
        %v624 = vpop.f32.mrf.mxu0
        %625 = vmatprep.mubr.f32.mxu0 0.0
        %626 = vmatmul.mubr.f32.gmra.mxu0 %v434
        %v627 = vpop.f32.mrf.mxu0
        %v628 = vadd.f32 0.0, %v627
        %v629 = vpop.f32.mrf.mxu0
        %630 = vmatprep.mubr.f32.mxu0 0.0
        %631 = vmatmul.mubr.f32.gmra.mxu0 %v437
        %v632 = vpop.f32.mrf.mxu0
        %v633 = vadd.f32 0.0, %v632
        %v634 = vpop.f32.mrf.mxu0
        %635 = vmatprep.mubr.f32.mxu0 0.0
        %636 = vmatmul.mubr.f32.gmra.mxu0 %v440
        %v637 = vpop.f32.mrf.mxu0
        %v638 = vadd.f32 0.0, %v637
        %v639 = vpop.f32.mrf.mxu0
        %640 = vmatprep.mubr.f32.mxu0 0.0
        %641 = vmatmul.mubr.f32.gmra.mxu0 %v443
        %v642 = vpop.f32.mrf.mxu0
        %v643 = vadd.f32 0.0, %v642
        %v644 = vpop.f32.mrf.mxu0
        %645 = vmatprep.mubr.f32.mxu0 0.0
        %646 = vmatmul.mubr.f32.gmra.mxu0 %v446
        %v647 = vpop.f32.mrf.mxu0
        %v648 = vadd.f32 0.0, %v647
        %v649 = vpop.f32.mrf.mxu0
        %650 = vmatprep.mubr.f32.mxu0 0.0
        %651 = vmatmul.mubr.f32.gmra.mxu0 %v449
        %v652 = vpop.f32.mrf.mxu0
        %v653 = vadd.f32 0.0, %v652
        %v654 = vpop.f32.mrf.mxu0
        %655 = vmatprep.mubr.f32.mxu0 0.0
        %656 = vmatmul.mubr.f32.gmra.mxu0 %v452
        %v657 = vpop.f32.mrf.mxu0
        %v658 = vadd.f32 0.0, %v657
        %v659 = vpop.f32.mrf.mxu0
        %660 = vmatprep.mubr.f32.mxu0 0.0
        %661 = vmatmul.mubr.f32.gmra.mxu0 %v455
        %v662 = vpop.f32.mrf.mxu0
        %v663 = vadd.f32 0.0, %v662
        %v664 = vpop.f32.mrf.mxu0
        %665 = vmatprep.mubr.f32.mxu0 0.0
        %666 = vmatmul.mubr.f32.gmra.mxu0 %v458
        %v667 = vpop.f32.mrf.mxu0
        %v668 = vadd.f32 0.0, %v667
        %v669 = vpop.f32.mrf.mxu0
        %670 = vmatprep.mubr.f32.mxu0 0.0
        %671 = vmatmul.mubr.f32.gmra.mxu0 %v461
        %v672 = vpop.f32.mrf.mxu0
        %v673 = vadd.f32 0.0, %v672
        %v674 = vpop.f32.mrf.mxu0
        %675 = vmatprep.mubr.f32.mxu0 0.0
        %676 = vmatmul.mubr.f32.gmra.mxu0 %v464
        %v677 = vpop.f32.mrf.mxu0
        %v678 = vadd.f32 0.0, %v677
        %v679 = vpop.f32.mrf.mxu0
        %680 = vmatprep.mubr.f32.mxu0 0.0
        %681 = vmatmul.mubr.f32.gmra.mxu0 %v467
        %v682 = vpop.f32.mrf.mxu0
        %v683 = vadd.f32 0.0, %v682
        %v684 = vpop.f32.mrf.mxu0
        %685 = vmatprep.mubr.f32.mxu0 0.0
        %686 = vmatmul.mubr.f32.gmra.mxu0 %v470
        %v687 = vpop.f32.mrf.mxu0
        %v688 = vadd.f32 0.0, %v687
        %v689 = vpop.f32.mrf.mxu0
        %690 = vmatprep.mubr.f32.mxu0 0.0
        %691 = vmatmul.mubr.f32.gmra.mxu0 %v473
        %v692 = vpop.f32.mrf.mxu0
        %v693 = vadd.f32 0.0, %v692
        %v694 = vpop.f32.mrf.mxu0
        %695 = vmatprep.mubr.f32.mxu0 0.0
        %696 = vmatmul.mubr.f32.gmra.mxu0 %v476
        %v697 = vpop.f32.mrf.mxu0
        %v698 = vadd.f32 0.0, %v697
        %v699 = vpop.f32.mrf.mxu0
        %700 = vmatprep.mubr.f32.mxu0 0.0
        %701 = vmatmul.mubr.f32.gmra.mxu0 %v479
        %v702 = vpop.f32.mrf.mxu0
        %v703 = vadd.f32 0.0, %v702
        %v704 = vpop.f32.mrf.mxu0
        %705 = vmatprep.mubr.f32.mxu0 0.0
        %706 = vmatmul.mubr.f32.gmra.mxu0 %v482
        %v707 = vpop.f32.mrf.mxu0
        %v708 = vadd.f32 0.0, %v707
        %v709 = vpop.f32.mrf.mxu0
        %710 = vdwg.mxu0
        %v711 = vmax.f32 %v553, %v573
        %v712 = vmax.f32 %v558, %v578
        %v713 = vmax.f32 %v563, %v583
        %v714 = vmax.f32 %v568, %v588
        %v715 = vmax.f32 %v711, %v593
        %v716 = vmax.f32 %v712, %v598
        %v717 = vmax.f32 %v713, %v603
        %v718 = vmax.f32 %v714, %v608
        %v719 = vmax.f32 %v715, %v613
        %v720 = vmax.f32 %v716, %v618
        %v721 = vmax.f32 %v717, %v623
        %v722 = vmax.f32 %v718, %v628
        %v723 = vmax.f32 %v719, %v633
        %v724 = vmax.f32 %v720, %v638
        %v725 = vmax.f32 %v721, %v643
        %v726 = vmax.f32 %v722, %v648
        %v727 = vmax.f32 %v723, %v653
        %v728 = vmax.f32 %v724, %v658
        %v729 = vmax.f32 %v725, %v663
        %v730 = vmax.f32 %v726, %v668
        %v731 = vmax.f32 %v727, %v673
        %v732 = vmax.f32 %v728, %v678
        %v733 = vmax.f32 %v729, %v683
        %v734 = vmax.f32 %v730, %v688
        %v735 = vmax.f32 %v731, %v693
        %v736 = vmax.f32 %v732, %v698
        %v737 = vmax.f32 %v733, %v703
        %v738 = vmax.f32 %v734, %v708
        %v739 = vmax.f32 %v735, %v736
        %v740 = vmax.f32 %v737, %v738
        %v741 = vmax.f32 %v739, %v740
        %v742 = vrot.slane %v741, 4
        %v743 = vmax.f32 %v741, %v742
        %v744 = vrot.slane %v743, 2
        %v745 = vmax.f32 %v743, %v744
        %v746 = vrot.slane %v745, 1
        %v747 = vmax.f32 %v745, %v746
        %v748 = vsub.f32 %v553, %v747
        %v749 = vsub.f32 %v558, %v747
        %v750 = vsub.f32 %v563, %v747
        %v751 = vsub.f32 %v568, %v747
        %v752 = vsub.f32 %v573, %v747
        %v753 = vsub.f32 %v578, %v747
        %v754 = vsub.f32 %v583, %v747
        %v755 = vsub.f32 %v588, %v747
        %v756 = vsub.f32 %v593, %v747
        %v757 = vsub.f32 %v598, %v747
        %v758 = vsub.f32 %v603, %v747
        %v759 = vsub.f32 %v608, %v747
        %v760 = vsub.f32 %v613, %v747
        %v761 = vsub.f32 %v618, %v747
        %v762 = vsub.f32 %v623, %v747
        %v763 = vsub.f32 %v628, %v747
        %v764 = vsub.f32 %v633, %v747
        %v765 = vsub.f32 %v638, %v747
        %v766 = vsub.f32 %v643, %v747
        %v767 = vsub.f32 %v648, %v747
        %v768 = vsub.f32 %v653, %v747
        %v769 = vsub.f32 %v658, %v747
        %v770 = vsub.f32 %v663, %v747
        %v771 = vsub.f32 %v668, %v747
        %v772 = vsub.f32 %v673, %v747
        %v773 = vsub.f32 %v678, %v747
        %v774 = vsub.f32 %v683, %v747
        %v775 = vsub.f32 %v688, %v747
        %v776 = vsub.f32 %v693, %v747
        %v777 = vsub.f32 %v698, %v747
        %v778 = vsub.f32 %v703, %v747
        %v779 = vsub.f32 %v708, %v747
        %v780 = vmul.f32 %v748, 1.442695
        %v781 = vpow.pop %v780
        %v782 = vmul.f32 %v749, 1.442695
        %v783 = vpow.pop %v782
        %v784 = vmul.f32 %v750, 1.442695
        %v785 = vpow.pop %v784
        %v786 = vmul.f32 %v751, 1.442695
        %v787 = vpow.pop %v786
        %v788 = vmul.f32 %v752, 1.442695
        %v789 = vpow.pop %v788
        %v790 = vmul.f32 %v753, 1.442695
        %v791 = vpow.pop %v790
        %v792 = vmul.f32 %v754, 1.442695
        %v793 = vpow.pop %v792
        %v794 = vmul.f32 %v755, 1.442695
        %v795 = vpow.pop %v794
        %v796 = vmul.f32 %v756, 1.442695
        %v797 = vpow.pop %v796
        %v798 = vmul.f32 %v757, 1.442695
        %v799 = vpow.pop %v798
        %v800 = vmul.f32 %v758, 1.442695
        %v801 = vpow.pop %v800
        %v802 = vmul.f32 %v759, 1.442695
        %v803 = vpow.pop %v802
        %v804 = vmul.f32 %v760, 1.442695
        %v805 = vpow.pop %v804
        %v806 = vmul.f32 %v761, 1.442695
        %v807 = vpow.pop %v806
        %v808 = vmul.f32 %v762, 1.442695
        %v809 = vpow.pop %v808
        %v810 = vmul.f32 %v763, 1.442695
        %v811 = vpow.pop %v810
        %v812 = vmul.f32 %v764, 1.442695
        %v813 = vpow.pop %v812
        %v814 = vmul.f32 %v765, 1.442695
        %v815 = vpow.pop %v814
        %v816 = vmul.f32 %v766, 1.442695
        %v817 = vpow.pop %v816
        %v818 = vmul.f32 %v767, 1.442695
        %v819 = vpow.pop %v818
        %v820 = vmul.f32 %v768, 1.442695
        %v821 = vpow.pop %v820
        %v822 = vmul.f32 %v769, 1.442695
        %v823 = vpow.pop %v822
        %v824 = vmul.f32 %v770, 1.442695
        %v825 = vpow.pop %v824
        %v826 = vmul.f32 %v771, 1.442695
        %v827 = vpow.pop %v826
        %v828 = vmul.f32 %v772, 1.442695
        %v829 = vpow.pop %v828
        %v830 = vmul.f32 %v773, 1.442695
        %v831 = vpow.pop %v830
        %v832 = vmul.f32 %v774, 1.442695
        %v833 = vpow.pop %v832
        %v834 = vmul.f32 %v775, 1.442695
        %v835 = vpow.pop %v834
        %v836 = vmul.f32 %v776, 1.442695
        %v837 = vpow.pop %v836
        %v838 = vmul.f32 %v777, 1.442695
        %v839 = vpow.pop %v838
        %v840 = vmul.f32 %v778, 1.442695
        %v841 = vpow.pop %v840
        %v842 = vmul.f32 %v779, 1.442695
        %v843 = vpow.pop %v842
        %v844 = vpack.c.bf16 %v783, %v781
        %v845 = vpack.c.bf16 %v787, %v785
        %v846 = vpack.c.bf16 %v791, %v789
        %v847 = vpack.c.bf16 %v795, %v793
        %v848 = vpack.c.bf16 %v799, %v797
        %v849 = vpack.c.bf16 %v803, %v801
        %v850 = vpack.c.bf16 %v807, %v805
        %v851 = vpack.c.bf16 %v811, %v809
        %v852 = vpack.c.bf16 %v815, %v813
        %v853 = vpack.c.bf16 %v819, %v817
        %v854 = vpack.c.bf16 %v823, %v821
        %v855 = vpack.c.bf16 %v827, %v825
        %v856 = vpack.c.bf16 %v831, %v829
        %v857 = vpack.c.bf16 %v835, %v833
        %v858 = vpack.c.bf16 %v839, %v837
        %v859 = vpack.c.bf16 %v843, %v841
        %860 = vmatprep.subr.bf16.mxu0 0
        %861 = vmatpush1.bf16.msra.mxu0 %v851
        %862 = vmatprep.subr.bf16.mxu0 0
        %863 = vmatpush1.bf16.msra.mxu0 %v850
        %864 = vmatprep.subr.bf16.mxu0 0
        %865 = vmatpush1.bf16.msra.mxu0 %v849
        %866 = vmatprep.subr.bf16.mxu0 0
        %867 = vmatpush1.bf16.msra.mxu0 %v848
        %868 = vmatprep.subr.bf16.mxu0 0
        %869 = vmatpush1.bf16.msra.mxu0 %v847
        %870 = vmatprep.subr.bf16.mxu0 0
        %871 = vmatpush1.bf16.msra.mxu0 %v846
        %872 = vmatprep.subr.bf16.mxu0 0
        %873 = vmatpush1.bf16.msra.mxu0 %v845
        %874 = vmatprep.subr.bf16.mxu0 0
        %875 = vmatpush1.bf16.msra.mxu0 %v844
        %876 = vmatprep.subr.bf16.mxu0 0
        %877 = vmatpush2.bf16.msra.mxu0 %v859
        %878 = vmatprep.subr.bf16.mxu0 0
        %879 = vmatpush2.bf16.msra.mxu0 %v858
        %880 = vmatprep.subr.bf16.mxu0 0
        %881 = vmatpush2.bf16.msra.mxu0 %v857
        %882 = vmatprep.subr.bf16.mxu0 0
        %883 = vmatpush2.bf16.msra.mxu0 %v856
        %884 = vmatprep.subr.bf16.mxu0 0
        %885 = vmatpush2.bf16.msra.mxu0 %v855
        %886 = vmatprep.subr.bf16.mxu0 0
        %887 = vmatpush2.bf16.msra.mxu0 %v854
        %888 = vmatprep.subr.bf16.mxu0 0
        %889 = vmatpush2.bf16.msra.mxu0 %v853
        %890 = vmatprep.subr.bf16.mxu0 0
        %891 = vmatpush2.bf16.msra.mxu0 %v852
        %892 = vmatprep.mubr.bf16.mxu0 %v322
        %893 = vmatmul.mubr.bf16.gmra.mxu0 %v321
        %v894 = vpop.f32.mrf.mxu0
        %v895 = vadd.f32 0.0, %v894
        %v896 = vpop.f32.mrf.mxu0
        %v897 = vpop.f32.mrf.mxu0
        %v898 = vpop.f32.mrf.mxu0
        %899 = vdwg.mxu0
        %v900 = vrcp.pop %v895
        %v901 = vlaneseq
        %v902 = vshrl.u32 %v901, 7
        %v903 = vsub.s32 4, %v902
        %v904 = vrot.slane %v900, %v903
        %v905 = vmul.f32 %v895, %v904
        %v906 = vsel %vm237, %v311, 0
        %908 = vmatprep.subr.mxu0 0.0
        %909 = vmatpush1.msra.mxu0 0.0
        %910 = vmatprep.subr.mxu0 0.0
        %911 = vmatpush1.msra.mxu0 0.0
        %912 = vmatprep.subr.mxu0 0.0
        %913 = vmatpush1.msra.mxu0 0.0
        %914 = vmatprep.subr.mxu0 0.0
        %915 = vmatpush1.msra.mxu0 0.0
        %916 = vmatprep.subr.mxu0 0.0
        %917 = vmatpush1.msra.mxu0 0.0
        %918 = vmatprep.subr.mxu0 0.0
        %919 = vmatpush1.msra.mxu0 0.0
        %920 = vmatprep.subr.mxu0 0.0
        %921 = vmatpush1.msra.mxu0 0.0
        %922 = vmatprep.subr.mxu0 0.0
        %923 = vmatpush1.msra.mxu0 0.0
        %924 = vmatprep.subr.mxu0 0.0
        %925 = vmatpush1.msra.mxu0 0.0
        %926 = vmatprep.subr.mxu0 0.0
        %927 = vmatpush1.msra.mxu0 0.0
        %928 = vmatprep.subr.mxu0 0.0
        %929 = vmatpush1.msra.mxu0 0.0
        %930 = vmatprep.subr.mxu0 0.0
        %931 = vmatpush1.msra.mxu0 0.0
        %932 = vmatprep.subr.mxu0 0.0
        %933 = vmatpush1.msra.mxu0 0.0
        %934 = vmatprep.subr.mxu0 0.0
        %935 = vmatpush1.msra.mxu0 0.0
        %936 = vmatprep.subr.mxu0 0.0
        %937 = vmatpush1.msra.mxu0 0.0
        %938 = vmatprep.subr.mxu0 0.0
        %939 = vmatpush1.msra.mxu0 %v906
        %940 = vmatprep.subr.mxu0 0.0
        %941 = vmatpush2.msra.mxu0 0.0
        %942 = vmatprep.subr.mxu0 0.0
        %943 = vmatpush2.msra.mxu0 0.0
        %944 = vmatprep.subr.mxu0 0.0
        %945 = vmatpush2.msra.mxu0 0.0
        %946 = vmatprep.subr.mxu0 0.0
        %947 = vmatpush2.msra.mxu0 0.0
        %948 = vmatprep.subr.mxu0 0.0
        %949 = vmatpush2.msra.mxu0 0.0
        %950 = vmatprep.subr.mxu0 0.0
        %951 = vmatpush2.msra.mxu0 0.0
        %952 = vmatprep.subr.mxu0 0.0
        %953 = vmatpush2.msra.mxu0 0.0
        %954 = vmatprep.subr.mxu0 0.0
        %955 = vmatpush2.msra.mxu0 0.0
        %956 = vmatprep.subr.mxu0 0.0
        %957 = vmatpush2.msra.mxu0 0.0
        %958 = vmatprep.subr.mxu0 0.0
        %959 = vmatpush2.msra.mxu0 0.0
        %960 = vmatprep.subr.mxu0 0.0
        %961 = vmatpush2.msra.mxu0 0.0
        %962 = vmatprep.subr.mxu0 0.0
        %963 = vmatpush2.msra.mxu0 0.0
        %964 = vmatprep.subr.mxu0 0.0
        %965 = vmatpush2.msra.mxu0 0.0
        %966 = vmatprep.subr.mxu0 0.0
        %967 = vmatpush2.msra.mxu0 0.0
        %968 = vmatprep.subr.mxu0 0.0
        %969 = vmatpush2.msra.mxu0 0.0
        %970 = vmatprep.subr.mxu0 0.0
        %971 = vmatpush2.msra.mxu0 0.0
        %972 = vmatprep.mubr.f32.mxu0 0.0
        %973 = vmatmul.mubr.f32.gmra.mxu0 %v389
        %v974 = vpop.f32.mrf.mxu0
        %v975 = vadd.f32 0.0, %v974
        %v976 = vpop.f32.mrf.mxu0
        %977 = vmatprep.mubr.f32.mxu0 0.0
        %978 = vmatmul.mubr.f32.gmra.mxu0 %v392
        %v979 = vpop.f32.mrf.mxu0
        %v980 = vadd.f32 0.0, %v979
        %v981 = vpop.f32.mrf.mxu0
        %982 = vmatprep.mubr.f32.mxu0 0.0
        %983 = vmatmul.mubr.f32.gmra.mxu0 %v395
        %v984 = vpop.f32.mrf.mxu0
        %v985 = vadd.f32 0.0, %v984
        %v986 = vpop.f32.mrf.mxu0
        %987 = vmatprep.mubr.f32.mxu0 0.0
        %988 = vmatmul.mubr.f32.gmra.mxu0 %v398
        %v989 = vpop.f32.mrf.mxu0
        %v990 = vadd.f32 0.0, %v989
        %v991 = vpop.f32.mrf.mxu0
        %992 = vmatprep.mubr.f32.mxu0 0.0
        %993 = vmatmul.mubr.f32.gmra.mxu0 %v401
        %v994 = vpop.f32.mrf.mxu0
        %v995 = vadd.f32 0.0, %v994
        %v996 = vpop.f32.mrf.mxu0
        %997 = vmatprep.mubr.f32.mxu0 0.0
        %998 = vmatmul.mubr.f32.gmra.mxu0 %v404
        %v999 = vpop.f32.mrf.mxu0
        %v1000 = vadd.f32 0.0, %v999
        %v1001 = vpop.f32.mrf.mxu0
        %1002 = vmatprep.mubr.f32.mxu0 0.0
        %1003 = vmatmul.mubr.f32.gmra.mxu0 %v407
        %v1004 = vpop.f32.mrf.mxu0
        %v1005 = vadd.f32 0.0, %v1004
        %v1006 = vpop.f32.mrf.mxu0
        %1007 = vmatprep.mubr.f32.mxu0 0.0
        %1008 = vmatmul.mubr.f32.gmra.mxu0 %v410
        %v1009 = vpop.f32.mrf.mxu0
        %v1010 = vadd.f32 0.0, %v1009
        %v1011 = vpop.f32.mrf.mxu0
        %1012 = vmatprep.mubr.f32.mxu0 0.0
        %1013 = vmatmul.mubr.f32.gmra.mxu0 %v413
        %v1014 = vpop.f32.mrf.mxu0
        %v1015 = vadd.f32 0.0, %v1014
        %v1016 = vpop.f32.mrf.mxu0
        %1017 = vmatprep.mubr.f32.mxu0 0.0
        %1018 = vmatmul.mubr.f32.gmra.mxu0 %v416
        %v1019 = vpop.f32.mrf.mxu0
        %v1020 = vadd.f32 0.0, %v1019
        %v1021 = vpop.f32.mrf.mxu0
        %1022 = vmatprep.mubr.f32.mxu0 0.0
        %1023 = vmatmul.mubr.f32.gmra.mxu0 %v419
        %v1024 = vpop.f32.mrf.mxu0
        %v1025 = vadd.f32 0.0, %v1024
        %v1026 = vpop.f32.mrf.mxu0
        %1027 = vmatprep.mubr.f32.mxu0 0.0
        %1028 = vmatmul.mubr.f32.gmra.mxu0 %v422
        %v1029 = vpop.f32.mrf.mxu0
        %v1030 = vadd.f32 0.0, %v1029
        %v1031 = vpop.f32.mrf.mxu0
        %1032 = vmatprep.mubr.f32.mxu0 0.0
        %1033 = vmatmul.mubr.f32.gmra.mxu0 %v425
        %v1034 = vpop.f32.mrf.mxu0
        %v1035 = vadd.f32 0.0, %v1034
        %v1036 = vpop.f32.mrf.mxu0
        %1037 = vmatprep.mubr.f32.mxu0 0.0
        %1038 = vmatmul.mubr.f32.gmra.mxu0 %v428
        %v1039 = vpop.f32.mrf.mxu0
        %v1040 = vadd.f32 0.0, %v1039
        %v1041 = vpop.f32.mrf.mxu0
        %1042 = vmatprep.mubr.f32.mxu0 0.0
        %1043 = vmatmul.mubr.f32.gmra.mxu0 %v431
        %v1044 = vpop.f32.mrf.mxu0
        %v1045 = vadd.f32 0.0, %v1044
        %v1046 = vpop.f32.mrf.mxu0
        %1047 = vmatprep.mubr.f32.mxu0 0.0
        %1048 = vmatmul.mubr.f32.gmra.mxu0 %v434
        %v1049 = vpop.f32.mrf.mxu0
        %v1050 = vadd.f32 0.0, %v1049
        %v1051 = vpop.f32.mrf.mxu0
        %1052 = vmatprep.mubr.f32.mxu0 0.0
        %1053 = vmatmul.mubr.f32.gmra.mxu0 %v437
        %v1054 = vpop.f32.mrf.mxu0
        %v1055 = vadd.f32 0.0, %v1054
        %v1056 = vpop.f32.mrf.mxu0
        %1057 = vmatprep.mubr.f32.mxu0 0.0
        %1058 = vmatmul.mubr.f32.gmra.mxu0 %v440
        %v1059 = vpop.f32.mrf.mxu0
        %v1060 = vadd.f32 0.0, %v1059
        %v1061 = vpop.f32.mrf.mxu0
        %1062 = vmatprep.mubr.f32.mxu0 0.0
        %1063 = vmatmul.mubr.f32.gmra.mxu0 %v443
        %v1064 = vpop.f32.mrf.mxu0
        %v1065 = vadd.f32 0.0, %v1064
        %v1066 = vpop.f32.mrf.mxu0
        %1067 = vmatprep.mubr.f32.mxu0 0.0
        %1068 = vmatmul.mubr.f32.gmra.mxu0 %v446
        %v1069 = vpop.f32.mrf.mxu0
        %v1070 = vadd.f32 0.0, %v1069
        %v1071 = vpop.f32.mrf.mxu0
        %1072 = vmatprep.mubr.f32.mxu0 0.0
        %1073 = vmatmul.mubr.f32.gmra.mxu0 %v449
        %v1074 = vpop.f32.mrf.mxu0
        %v1075 = vadd.f32 0.0, %v1074
        %v1076 = vpop.f32.mrf.mxu0
        %1077 = vmatprep.mubr.f32.mxu0 0.0
        %1078 = vmatmul.mubr.f32.gmra.mxu0 %v452
        %v1079 = vpop.f32.mrf.mxu0
        %v1080 = vadd.f32 0.0, %v1079
        %v1081 = vpop.f32.mrf.mxu0
        %1082 = vmatprep.mubr.f32.mxu0 0.0
        %1083 = vmatmul.mubr.f32.gmra.mxu0 %v455
        %v1084 = vpop.f32.mrf.mxu0
        %v1085 = vadd.f32 0.0, %v1084
        %v1086 = vpop.f32.mrf.mxu0
        %1087 = vmatprep.mubr.f32.mxu0 0.0
        %1088 = vmatmul.mubr.f32.gmra.mxu0 %v458
        %v1089 = vpop.f32.mrf.mxu0
        %v1090 = vadd.f32 0.0, %v1089
        %v1091 = vpop.f32.mrf.mxu0
        %1092 = vmatprep.mubr.f32.mxu0 0.0
        %1093 = vmatmul.mubr.f32.gmra.mxu0 %v461
        %v1094 = vpop.f32.mrf.mxu0
        %v1095 = vadd.f32 0.0, %v1094
        %v1096 = vpop.f32.mrf.mxu0
        %1097 = vmatprep.mubr.f32.mxu0 0.0
        %1098 = vmatmul.mubr.f32.gmra.mxu0 %v464
        %v1099 = vpop.f32.mrf.mxu0
        %v1100 = vadd.f32 0.0, %v1099
        %v1101 = vpop.f32.mrf.mxu0
        %1102 = vmatprep.mubr.f32.mxu0 0.0
        %1103 = vmatmul.mubr.f32.gmra.mxu0 %v467
        %v1104 = vpop.f32.mrf.mxu0
        %v1105 = vadd.f32 0.0, %v1104
        %v1106 = vpop.f32.mrf.mxu0
        %1107 = vmatprep.mubr.f32.mxu0 0.0
        %1108 = vmatmul.mubr.f32.gmra.mxu0 %v470
        %v1109 = vpop.f32.mrf.mxu0
        %v1110 = vadd.f32 0.0, %v1109
        %v1111 = vpop.f32.mrf.mxu0
        %1112 = vmatprep.mubr.f32.mxu0 0.0
        %1113 = vmatmul.mubr.f32.gmra.mxu0 %v473
        %v1114 = vpop.f32.mrf.mxu0
        %v1115 = vadd.f32 0.0, %v1114
        %v1116 = vpop.f32.mrf.mxu0
        %1117 = vmatprep.mubr.f32.mxu0 0.0
        %1118 = vmatmul.mubr.f32.gmra.mxu0 %v476
        %v1119 = vpop.f32.mrf.mxu0
        %v1120 = vadd.f32 0.0, %v1119
        %v1121 = vpop.f32.mrf.mxu0
        %1122 = vmatprep.mubr.f32.mxu0 0.0
        %1123 = vmatmul.mubr.f32.gmra.mxu0 %v479
        %v1124 = vpop.f32.mrf.mxu0
        %v1125 = vadd.f32 0.0, %v1124
        %v1126 = vpop.f32.mrf.mxu0
        %1127 = vmatprep.mubr.f32.mxu0 0.0
        %1128 = vmatmul.mubr.f32.gmra.mxu0 %v482
        %v1129 = vpop.f32.mrf.mxu0
        %v1130 = vadd.f32 0.0, %v1129
        %v1131 = vpop.f32.mrf.mxu0
        %1132 = vdwg.mxu0
        %v1133 = vmax.f32 %v975, %v995
        %v1134 = vmax.f32 %v980, %v1000
        %v1135 = vmax.f32 %v985, %v1005
        %v1136 = vmax.f32 %v990, %v1010
        %v1137 = vmax.f32 %v1133, %v1015
        %v1138 = vmax.f32 %v1134, %v1020
        %v1139 = vmax.f32 %v1135, %v1025
        %v1140 = vmax.f32 %v1136, %v1030
        %v1141 = vmax.f32 %v1137, %v1035
        %v1142 = vmax.f32 %v1138, %v1040
        %v1143 = vmax.f32 %v1139, %v1045
        %v1144 = vmax.f32 %v1140, %v1050
        %v1145 = vmax.f32 %v1141, %v1055
        %v1146 = vmax.f32 %v1142, %v1060
        %v1147 = vmax.f32 %v1143, %v1065
        %v1148 = vmax.f32 %v1144, %v1070
        %v1149 = vmax.f32 %v1145, %v1075
        %v1150 = vmax.f32 %v1146, %v1080
        %v1151 = vmax.f32 %v1147, %v1085
        %v1152 = vmax.f32 %v1148, %v1090
        %v1153 = vmax.f32 %v1149, %v1095
        %v1154 = vmax.f32 %v1150, %v1100
        %v1155 = vmax.f32 %v1151, %v1105
        %v1156 = vmax.f32 %v1152, %v1110
        %v1157 = vmax.f32 %v1153, %v1115
        %v1158 = vmax.f32 %v1154, %v1120
        %v1159 = vmax.f32 %v1155, %v1125
        %v1160 = vmax.f32 %v1156, %v1130
        %v1161 = vmax.f32 %v1157, %v1158
        %v1162 = vmax.f32 %v1159, %v1160
        %v1163 = vmax.f32 %v1161, %v1162
        %v1164 = vrot.slane %v1163, 4
        %v1165 = vmax.f32 %v1163, %v1164
        %v1166 = vrot.slane %v1165, 2
        %v1167 = vmax.f32 %v1165, %v1166
        %v1168 = vrot.slane %v1167, 1
        %v1169 = vmax.f32 %v1167, %v1168
        %v1170 = vsub.f32 %v975, %v1169
        %v1171 = vsub.f32 %v980, %v1169
        %v1172 = vsub.f32 %v985, %v1169
        %v1173 = vsub.f32 %v990, %v1169
        %v1174 = vsub.f32 %v995, %v1169
        %v1175 = vsub.f32 %v1000, %v1169
        %v1176 = vsub.f32 %v1005, %v1169
        %v1177 = vsub.f32 %v1010, %v1169
        %v1178 = vsub.f32 %v1015, %v1169
        %v1179 = vsub.f32 %v1020, %v1169
        %v1180 = vsub.f32 %v1025, %v1169
        %v1181 = vsub.f32 %v1030, %v1169
        %v1182 = vsub.f32 %v1035, %v1169
        %v1183 = vsub.f32 %v1040, %v1169
        %v1184 = vsub.f32 %v1045, %v1169
        %v1185 = vsub.f32 %v1050, %v1169
        %v1186 = vsub.f32 %v1055, %v1169
        %v1187 = vsub.f32 %v1060, %v1169
        %v1188 = vsub.f32 %v1065, %v1169
        %v1189 = vsub.f32 %v1070, %v1169
        %v1190 = vsub.f32 %v1075, %v1169
        %v1191 = vsub.f32 %v1080, %v1169
        %v1192 = vsub.f32 %v1085, %v1169
        %v1193 = vsub.f32 %v1090, %v1169
        %v1194 = vsub.f32 %v1095, %v1169
        %v1195 = vsub.f32 %v1100, %v1169
        %v1196 = vsub.f32 %v1105, %v1169
        %v1197 = vsub.f32 %v1110, %v1169
        %v1198 = vsub.f32 %v1115, %v1169
        %v1199 = vsub.f32 %v1120, %v1169
        %v1200 = vsub.f32 %v1125, %v1169
        %v1201 = vsub.f32 %v1130, %v1169
        %v1202 = vmul.f32 %v1170, 1.442695
        %v1203 = vpow.pop %v1202
        %v1204 = vmul.f32 %v1171, 1.442695
        %v1205 = vpow.pop %v1204
        %v1206 = vmul.f32 %v1172, 1.442695
        %v1207 = vpow.pop %v1206
        %v1208 = vmul.f32 %v1173, 1.442695
        %v1209 = vpow.pop %v1208
        %v1210 = vmul.f32 %v1174, 1.442695
        %v1211 = vpow.pop %v1210
        %v1212 = vmul.f32 %v1175, 1.442695
        %v1213 = vpow.pop %v1212
        %v1214 = vmul.f32 %v1176, 1.442695
        %v1215 = vpow.pop %v1214
        %v1216 = vmul.f32 %v1177, 1.442695
        %v1217 = vpow.pop %v1216
        %v1218 = vmul.f32 %v1178, 1.442695
        %v1219 = vpow.pop %v1218
        %v1220 = vmul.f32 %v1179, 1.442695
        %v1221 = vpow.pop %v1220
        %v1222 = vmul.f32 %v1180, 1.442695
        %v1223 = vpow.pop %v1222
        %v1224 = vmul.f32 %v1181, 1.442695
        %v1225 = vpow.pop %v1224
        %v1226 = vmul.f32 %v1182, 1.442695
        %v1227 = vpow.pop %v1226
        %v1228 = vmul.f32 %v1183, 1.442695
        %v1229 = vpow.pop %v1228
        %v1230 = vmul.f32 %v1184, 1.442695
        %v1231 = vpow.pop %v1230
        %v1232 = vmul.f32 %v1185, 1.442695
        %v1233 = vpow.pop %v1232
        %v1234 = vmul.f32 %v1186, 1.442695
        %v1235 = vpow.pop %v1234
        %v1236 = vmul.f32 %v1187, 1.442695
        %v1237 = vpow.pop %v1236
        %v1238 = vmul.f32 %v1188, 1.442695
        %v1239 = vpow.pop %v1238
        %v1240 = vmul.f32 %v1189, 1.442695
        %v1241 = vpow.pop %v1240
        %v1242 = vmul.f32 %v1190, 1.442695
        %v1243 = vpow.pop %v1242
        %v1244 = vmul.f32 %v1191, 1.442695
        %v1245 = vpow.pop %v1244
        %v1246 = vmul.f32 %v1192, 1.442695
        %v1247 = vpow.pop %v1246
        %v1248 = vmul.f32 %v1193, 1.442695
        %v1249 = vpow.pop %v1248
        %v1250 = vmul.f32 %v1194, 1.442695
        %v1251 = vpow.pop %v1250
        %v1252 = vmul.f32 %v1195, 1.442695
        %v1253 = vpow.pop %v1252
        %v1254 = vmul.f32 %v1196, 1.442695
        %v1255 = vpow.pop %v1254
        %v1256 = vmul.f32 %v1197, 1.442695
        %v1257 = vpow.pop %v1256
        %v1258 = vmul.f32 %v1198, 1.442695
        %v1259 = vpow.pop %v1258
        %v1260 = vmul.f32 %v1199, 1.442695
        %v1261 = vpow.pop %v1260
        %v1262 = vmul.f32 %v1200, 1.442695
        %v1263 = vpow.pop %v1262
        %v1264 = vmul.f32 %v1201, 1.442695
        %v1265 = vpow.pop %v1264
        %v1266 = vpack.c.bf16 %v1205, %v1203
        %v1267 = vpack.c.bf16 %v1209, %v1207
        %v1268 = vpack.c.bf16 %v1213, %v1211
        %v1269 = vpack.c.bf16 %v1217, %v1215
        %v1270 = vpack.c.bf16 %v1221, %v1219
        %v1271 = vpack.c.bf16 %v1225, %v1223
        %v1272 = vpack.c.bf16 %v1229, %v1227
        %v1273 = vpack.c.bf16 %v1233, %v1231
        %v1274 = vpack.c.bf16 %v1237, %v1235
        %v1275 = vpack.c.bf16 %v1241, %v1239
        %v1276 = vpack.c.bf16 %v1245, %v1243
        %v1277 = vpack.c.bf16 %v1249, %v1247
        %v1278 = vpack.c.bf16 %v1253, %v1251
        %v1279 = vpack.c.bf16 %v1257, %v1255
        %v1280 = vpack.c.bf16 %v1261, %v1259
        %v1281 = vpack.c.bf16 %v1265, %v1263
        %1282 = vmatprep.subr.bf16.mxu0 0
        %1283 = vmatpush1.bf16.msra.mxu0 %v1273
        %1284 = vmatprep.subr.bf16.mxu0 0
        %1285 = vmatpush1.bf16.msra.mxu0 %v1272
        %1286 = vmatprep.subr.bf16.mxu0 0
        %1287 = vmatpush1.bf16.msra.mxu0 %v1271
        %1288 = vmatprep.subr.bf16.mxu0 0
        %1289 = vmatpush1.bf16.msra.mxu0 %v1270
        %1290 = vmatprep.subr.bf16.mxu0 0
        %1291 = vmatpush1.bf16.msra.mxu0 %v1269
        %1292 = vmatprep.subr.bf16.mxu0 0
        %1293 = vmatpush1.bf16.msra.mxu0 %v1268
        %1294 = vmatprep.subr.bf16.mxu0 0
        %1295 = vmatpush1.bf16.msra.mxu0 %v1267
        %1296 = vmatprep.subr.bf16.mxu0 0
        %1297 = vmatpush1.bf16.msra.mxu0 %v1266
        %1298 = vmatprep.subr.bf16.mxu0 0
        %1299 = vmatpush2.bf16.msra.mxu0 %v1281
        %1300 = vmatprep.subr.bf16.mxu0 0
        %1301 = vmatpush2.bf16.msra.mxu0 %v1280
        %1302 = vmatprep.subr.bf16.mxu0 0
        %1303 = vmatpush2.bf16.msra.mxu0 %v1279
        %1304 = vmatprep.subr.bf16.mxu0 0
        %1305 = vmatpush2.bf16.msra.mxu0 %v1278
        %1306 = vmatprep.subr.bf16.mxu0 0
        %1307 = vmatpush2.bf16.msra.mxu0 %v1277
        %1308 = vmatprep.subr.bf16.mxu0 0
        %1309 = vmatpush2.bf16.msra.mxu0 %v1276
        %1310 = vmatprep.subr.bf16.mxu0 0
        %1311 = vmatpush2.bf16.msra.mxu0 %v1275
        %1312 = vmatprep.subr.bf16.mxu0 0
        %1313 = vmatpush2.bf16.msra.mxu0 %v1274
        %1314 = vmatprep.mubr.bf16.mxu0 %v322
        %1315 = vmatmul.mubr.bf16.gmra.mxu0 %v321
        %v1316 = vpop.f32.mrf.mxu0
        %v1317 = vadd.f32 0.0, %v1316
        %v1318 = vpop.f32.mrf.mxu0
        %v1319 = vpop.f32.mrf.mxu0
        %v1320 = vpop.f32.mrf.mxu0
        %1321 = vdwg.mxu0
        %v1322 = vrcp.pop %v1317
        %v1323 = vlaneseq
        %v1324 = vshrl.u32 %v1323, 7
        %v1325 = vsub.s32 4, %v1324
        %v1326 = vrot.slane %v1322, %v1325
        %v1327 = vmul.f32 %v1317, %v1326
        %v1328 = vadd.f32 %v905, %v230
        %v1329 = vadd.f32 %v1327, %v232
        %v1331 = vsel %vm237, %v1328, 0
        %v1334 = vsel %vm237, %v1329, 0
        %1336 = vmatprep.subr.mxu0 0.0
        %1337 = vmatpush1.msra.mxu0 0.0
        %1338 = vmatprep.subr.mxu0 0.0
        %1339 = vmatpush1.msra.mxu0 0.0
        %1340 = vmatprep.subr.mxu0 0.0
        %1341 = vmatpush1.msra.mxu0 0.0
        %1342 = vmatprep.subr.mxu0 0.0
        %1343 = vmatpush1.msra.mxu0 0.0
        %1344 = vmatprep.subr.mxu0 0.0
        %1345 = vmatpush1.msra.mxu0 0.0
        %1346 = vmatprep.subr.mxu0 0.0
        %1347 = vmatpush1.msra.mxu0 0.0
        %1348 = vmatprep.subr.mxu0 0.0
        %1349 = vmatpush1.msra.mxu0 0.0
        %1350 = vmatprep.subr.mxu0 0.0
        %1351 = vmatpush1.msra.mxu0 0.0
        %1352 = vmatprep.subr.mxu0 0.0
        %1353 = vmatpush1.msra.mxu0 0.0
        %1354 = vmatprep.subr.mxu0 0.0
        %1355 = vmatpush1.msra.mxu0 0.0
        %1356 = vmatprep.subr.mxu0 0.0
        %1357 = vmatpush1.msra.mxu0 0.0
        %1358 = vmatprep.subr.mxu0 0.0
        %1359 = vmatpush1.msra.mxu0 0.0
        %1360 = vmatprep.subr.mxu0 0.0
        %1361 = vmatpush1.msra.mxu0 0.0
        %1362 = vmatprep.subr.mxu0 0.0
        %1363 = vmatpush1.msra.mxu0 0.0
        %1364 = vmatprep.subr.mxu0 0.0
        %1365 = vmatpush1.msra.mxu0 0.0
        %1366 = vmatprep.subr.mxu0 %v1334
        %1367 = vmatpush1.msra.mxu0 %v1331
        %1368 = vmatprep.subr.mxu0 0.0
        %1369 = vmatpush2.msra.mxu0 0.0
        %1370 = vmatprep.subr.mxu0 0.0
        %1371 = vmatpush2.msra.mxu0 0.0
        %1372 = vmatprep.subr.mxu0 0.0
        %1373 = vmatpush2.msra.mxu0 0.0
        %1374 = vmatprep.subr.mxu0 0.0
        %1375 = vmatpush2.msra.mxu0 0.0
        %1376 = vmatprep.subr.mxu0 0.0
        %1377 = vmatpush2.msra.mxu0 0.0
        %1378 = vmatprep.subr.mxu0 0.0
        %1379 = vmatpush2.msra.mxu0 0.0
        %1380 = vmatprep.subr.mxu0 0.0
        %1381 = vmatpush2.msra.mxu0 0.0
        %1382 = vmatprep.subr.mxu0 0.0
        %1383 = vmatpush2.msra.mxu0 0.0
        %1384 = vmatprep.subr.mxu0 0.0
        %1385 = vmatpush2.msra.mxu0 0.0
        %1386 = vmatprep.subr.mxu0 0.0
        %1387 = vmatpush2.msra.mxu0 0.0
        %1388 = vmatprep.subr.mxu0 0.0
        %1389 = vmatpush2.msra.mxu0 0.0
        %1390 = vmatprep.subr.mxu0 0.0
        %1391 = vmatpush2.msra.mxu0 0.0
        %1392 = vmatprep.subr.mxu0 0.0
        %1393 = vmatpush2.msra.mxu0 0.0
        %1394 = vmatprep.subr.mxu0 0.0
        %1395 = vmatpush2.msra.mxu0 0.0
        %1396 = vmatprep.subr.mxu0 0.0
        %1397 = vmatpush2.msra.mxu0 0.0
        %1398 = vmatprep.subr.mxu0 0.0
        %1399 = vmatpush2.msra.mxu0 0.0
        %1400 = vmatprep.mubr.f32.mxu0 0.0
        %1401 = vmatmul.mubr.f32.gmra.mxu0 %v235
        %v1402 = vpop.f32.mrf.mxu0
        %v1403 = vadd.f32 0.0, %v1402
        %v1404 = vpop.f32.mrf.mxu0
        %v1405 = vadd.f32 0.0, %v1404
        %1406 = vdwg.mxu0
        %v1409 = vrot.slane %v1403, 4
        %v1410 = vrot.slane %v1405, 4
        %v1413 = vsel %vm237, %v1409, 1.0
        %v1414 = vsel %vm237, %v1410, 1.0
        %v1415 = vpack.c.bf16 %v1413, %v1413
        %v1416 = vpack.c.bf16 %v1414, %v1414
        %1417 = vxpose.xlu0.b32.start [1/16] %v1328, 128
        %1418 = vxpose.xlu0.b32.cont [2/16] 0.0, 128
        %1419 = vxpose.xlu0.b32.cont [3/16] 0.0, 128
        %1420 = vxpose.xlu0.b32.cont [4/16] 0.0, 128
        %1421 = vxpose.xlu0.b32.cont [5/16] 0.0, 128
        %1422 = vxpose.xlu0.b32.cont [6/16] 0.0, 128
        %1423 = vxpose.xlu0.b32.cont [7/16] 0.0, 128
        %1424 = vxpose.xlu0.b32.cont [8/16] 0.0, 128
        %1425 = vxpose.xlu0.b32.cont [9/16] 0.0, 128
        %1426 = vxpose.xlu0.b32.cont [10/16] 0.0, 128
        %1427 = vxpose.xlu0.b32.cont [11/16] 0.0, 128
        %1428 = vxpose.xlu0.b32.cont [12/16] 0.0, 128
        %1429 = vxpose.xlu0.b32.cont [13/16] 0.0, 128
        %1430 = vxpose.xlu0.b32.cont [14/16] 0.0, 128
        %1431 = vxpose.xlu0.b32.cont [15/16] 0.0, 128
        %1432 = vxpose.xlu0.b32.end [16/16] 0.0, 128
        %v1433 = vpop.trf.xlu0
        %v1434 = vpop.trf.xlu0
        %v1435 = vpop.trf.xlu0
        %v1436 = vpop.trf.xlu0
        %v1437 = vpop.trf.xlu0
        %v1438 = vpop.trf.xlu0
        %v1439 = vpop.trf.xlu0
        %v1440 = vpop.trf.xlu0
        %v1441 = vpop.trf.xlu0
        %v1442 = vpop.trf.xlu0
        %v1443 = vpop.trf.xlu0
        %v1444 = vpop.trf.xlu0
        %v1445 = vpop.trf.xlu0
        %v1446 = vpop.trf.xlu0
        %v1447 = vpop.trf.xlu0
        %v1448 = vpop.trf.xlu0
        %1449 = vxpose.xlu0.b32.start [1/16] %v1329, 128
        %1450 = vxpose.xlu0.b32.cont [2/16] 0.0, 128
        %1451 = vxpose.xlu0.b32.cont [3/16] 0.0, 128
        %1452 = vxpose.xlu0.b32.cont [4/16] 0.0, 128
        %1453 = vxpose.xlu0.b32.cont [5/16] 0.0, 128
        %1454 = vxpose.xlu0.b32.cont [6/16] 0.0, 128
        %1455 = vxpose.xlu0.b32.cont [7/16] 0.0, 128
        %1456 = vxpose.xlu0.b32.cont [8/16] 0.0, 128
        %1457 = vxpose.xlu0.b32.cont [9/16] 0.0, 128
        %1458 = vxpose.xlu0.b32.cont [10/16] 0.0, 128
        %1459 = vxpose.xlu0.b32.cont [11/16] 0.0, 128
        %1460 = vxpose.xlu0.b32.cont [12/16] 0.0, 128
        %1461 = vxpose.xlu0.b32.cont [13/16] 0.0, 128
        %1462 = vxpose.xlu0.b32.cont [14/16] 0.0, 128
        %1463 = vxpose.xlu0.b32.cont [15/16] 0.0, 128
        %1464 = vxpose.xlu0.b32.end [16/16] 0.0, 128
        %v1465 = vpop.trf.xlu0
        %v1466 = vpop.trf.xlu0
        %v1467 = vpop.trf.xlu0
        %v1468 = vpop.trf.xlu0
        %v1469 = vpop.trf.xlu0
        %v1470 = vpop.trf.xlu0
        %v1471 = vpop.trf.xlu0
        %v1472 = vpop.trf.xlu0
        %v1473 = vpop.trf.xlu0
        %v1474 = vpop.trf.xlu0
        %v1475 = vpop.trf.xlu0
        %v1476 = vpop.trf.xlu0
        %v1477 = vpop.trf.xlu0
        %v1478 = vpop.trf.xlu0
        %v1479 = vpop.trf.xlu0
        %v1480 = vpop.trf.xlu0
        %v1482 = vsel %vm233, %v1433, 0
        %v1485 = vsel %vm233, %v1434, 0
        %v1488 = vsel %vm233, %v1435, 0
        %v1491 = vsel %vm233, %v1436, 0
        %v1494 = vsel %vm233, %v1437, 0
        %v1497 = vsel %vm233, %v1438, 0
        %v1500 = vsel %vm233, %v1439, 0
        %v1503 = vsel %vm233, %v1440, 0
        %v1506 = vsel %vm233, %v1441, 0
        %v1509 = vsel %vm233, %v1442, 0
        %v1512 = vsel %vm233, %v1443, 0
        %v1515 = vsel %vm233, %v1444, 0
        %v1518 = vsel %vm233, %v1445, 0
        %v1521 = vsel %vm233, %v1446, 0
        %v1524 = vsel %vm233, %v1447, 0
        %v1527 = vsel %vm233, %v1448, 0
        %v1530 = vsel %vm233, %v1465, 0
        %v1533 = vsel %vm233, %v1466, 0
        %v1536 = vsel %vm233, %v1467, 0
        %v1539 = vsel %vm233, %v1468, 0
        %v1542 = vsel %vm233, %v1469, 0
        %v1545 = vsel %vm233, %v1470, 0
        %v1548 = vsel %vm233, %v1471, 0
        %v1551 = vsel %vm233, %v1472, 0
        %v1554 = vsel %vm233, %v1473, 0
        %v1557 = vsel %vm233, %v1474, 0
        %v1560 = vsel %vm233, %v1475, 0
        %v1563 = vsel %vm233, %v1476, 0
        %v1566 = vsel %vm233, %v1477, 0
        %v1569 = vsel %vm233, %v1478, 0
        %v1572 = vsel %vm233, %v1479, 0
        %v1575 = vsel %vm233, %v1480, 0
        %v1577 = vsel %vm237, %v1403, 0
        %1579 = vmatprep.subr.mxu0 0.0
        %1580 = vmatpush1.msra.mxu0 0.0
        %1581 = vmatprep.subr.mxu0 0.0
        %1582 = vmatpush1.msra.mxu0 0.0
        %1583 = vmatprep.subr.mxu0 0.0
        %1584 = vmatpush1.msra.mxu0 0.0
        %1585 = vmatprep.subr.mxu0 0.0
        %1586 = vmatpush1.msra.mxu0 0.0
        %1587 = vmatprep.subr.mxu0 0.0
        %1588 = vmatpush1.msra.mxu0 0.0
        %1589 = vmatprep.subr.mxu0 0.0
        %1590 = vmatpush1.msra.mxu0 0.0
        %1591 = vmatprep.subr.mxu0 0.0
        %1592 = vmatpush1.msra.mxu0 0.0
        %1593 = vmatprep.subr.mxu0 0.0
        %1594 = vmatpush1.msra.mxu0 0.0
        %1595 = vmatprep.subr.mxu0 0.0
        %1596 = vmatpush1.msra.mxu0 0.0
        %1597 = vmatprep.subr.mxu0 0.0
        %1598 = vmatpush1.msra.mxu0 0.0
        %1599 = vmatprep.subr.mxu0 0.0
        %1600 = vmatpush1.msra.mxu0 0.0
        %1601 = vmatprep.subr.mxu0 0.0
        %1602 = vmatpush1.msra.mxu0 0.0
        %1603 = vmatprep.subr.mxu0 0.0
        %1604 = vmatpush1.msra.mxu0 0.0
        %1605 = vmatprep.subr.mxu0 0.0
        %1606 = vmatpush1.msra.mxu0 0.0
        %1607 = vmatprep.subr.mxu0 0.0
        %1608 = vmatpush1.msra.mxu0 0.0
        %1609 = vmatprep.subr.mxu0 0.0
        %1610 = vmatpush1.msra.mxu0 %v1577
        %1611 = vmatprep.subr.mxu0 0.0
        %1612 = vmatpush2.msra.mxu0 0.0
        %1613 = vmatprep.subr.mxu0 0.0
        %1614 = vmatpush2.msra.mxu0 0.0
        %1615 = vmatprep.subr.mxu0 0.0
        %1616 = vmatpush2.msra.mxu0 0.0
        %1617 = vmatprep.subr.mxu0 0.0
        %1618 = vmatpush2.msra.mxu0 0.0
        %1619 = vmatprep.subr.mxu0 0.0
        %1620 = vmatpush2.msra.mxu0 0.0
        %1621 = vmatprep.subr.mxu0 0.0
        %1622 = vmatpush2.msra.mxu0 0.0
        %1623 = vmatprep.subr.mxu0 0.0
        %1624 = vmatpush2.msra.mxu0 0.0
        %1625 = vmatprep.subr.mxu0 0.0
        %1626 = vmatpush2.msra.mxu0 0.0
        %1627 = vmatprep.subr.mxu0 0.0
        %1628 = vmatpush2.msra.mxu0 0.0
        %1629 = vmatprep.subr.mxu0 0.0
        %1630 = vmatpush2.msra.mxu0 0.0
        %1631 = vmatprep.subr.mxu0 0.0
        %1632 = vmatpush2.msra.mxu0 0.0
        %1633 = vmatprep.subr.mxu0 0.0
        %1634 = vmatpush2.msra.mxu0 0.0
        %1635 = vmatprep.subr.mxu0 0.0
        %1636 = vmatpush2.msra.mxu0 0.0
        %1637 = vmatprep.subr.mxu0 0.0
        %1638 = vmatpush2.msra.mxu0 0.0
        %1639 = vmatprep.subr.mxu0 0.0
        %1640 = vmatpush2.msra.mxu0 0.0
        %1641 = vmatprep.subr.mxu0 0.0
        %1642 = vmatpush2.msra.mxu0 0.0
        %1643 = vmatprep.mubr.f32.mxu0 0.0
        %1644 = vmatmul.mubr.f32.gmra.mxu0 %v1482
        %v1645 = vpop.f32.mrf.mxu0
        %v1646 = vadd.f32 0.0, %v1645
        %v1647 = vpop.f32.mrf.mxu0
        %1648 = vmatprep.mubr.f32.mxu0 0.0
        %1649 = vmatmul.mubr.f32.gmra.mxu0 %v1485
        %v1650 = vpop.f32.mrf.mxu0
        %v1651 = vadd.f32 0.0, %v1650
        %v1652 = vpop.f32.mrf.mxu0
        %1653 = vmatprep.mubr.f32.mxu0 0.0
        %1654 = vmatmul.mubr.f32.gmra.mxu0 %v1488
        %v1655 = vpop.f32.mrf.mxu0
        %v1656 = vadd.f32 0.0, %v1655
        %v1657 = vpop.f32.mrf.mxu0
        %1658 = vmatprep.mubr.f32.mxu0 0.0
        %1659 = vmatmul.mubr.f32.gmra.mxu0 %v1491
        %v1660 = vpop.f32.mrf.mxu0
        %v1661 = vadd.f32 0.0, %v1660
        %v1662 = vpop.f32.mrf.mxu0
        %1663 = vmatprep.mubr.f32.mxu0 0.0
        %1664 = vmatmul.mubr.f32.gmra.mxu0 %v1494
        %v1665 = vpop.f32.mrf.mxu0
        %v1666 = vadd.f32 0.0, %v1665
        %v1667 = vpop.f32.mrf.mxu0
        %1668 = vmatprep.mubr.f32.mxu0 0.0
        %1669 = vmatmul.mubr.f32.gmra.mxu0 %v1497
        %v1670 = vpop.f32.mrf.mxu0
        %v1671 = vadd.f32 0.0, %v1670
        %v1672 = vpop.f32.mrf.mxu0
        %1673 = vmatprep.mubr.f32.mxu0 0.0
        %1674 = vmatmul.mubr.f32.gmra.mxu0 %v1500
        %v1675 = vpop.f32.mrf.mxu0
        %v1676 = vadd.f32 0.0, %v1675
        %v1677 = vpop.f32.mrf.mxu0
        %1678 = vmatprep.mubr.f32.mxu0 0.0
        %1679 = vmatmul.mubr.f32.gmra.mxu0 %v1503
        %v1680 = vpop.f32.mrf.mxu0
        %v1681 = vadd.f32 0.0, %v1680
        %v1682 = vpop.f32.mrf.mxu0
        %1683 = vmatprep.mubr.f32.mxu0 0.0
        %1684 = vmatmul.mubr.f32.gmra.mxu0 %v1506
        %v1685 = vpop.f32.mrf.mxu0
        %v1686 = vadd.f32 0.0, %v1685
        %v1687 = vpop.f32.mrf.mxu0
        %1688 = vmatprep.mubr.f32.mxu0 0.0
        %1689 = vmatmul.mubr.f32.gmra.mxu0 %v1509
        %v1690 = vpop.f32.mrf.mxu0
        %v1691 = vadd.f32 0.0, %v1690
        %v1692 = vpop.f32.mrf.mxu0
        %1693 = vmatprep.mubr.f32.mxu0 0.0
        %1694 = vmatmul.mubr.f32.gmra.mxu0 %v1512
        %v1695 = vpop.f32.mrf.mxu0
        %v1696 = vadd.f32 0.0, %v1695
        %v1697 = vpop.f32.mrf.mxu0
        %1698 = vmatprep.mubr.f32.mxu0 0.0
        %1699 = vmatmul.mubr.f32.gmra.mxu0 %v1515
        %v1700 = vpop.f32.mrf.mxu0
        %v1701 = vadd.f32 0.0, %v1700
        %v1702 = vpop.f32.mrf.mxu0
        %1703 = vmatprep.mubr.f32.mxu0 0.0
        %1704 = vmatmul.mubr.f32.gmra.mxu0 %v1518
        %v1705 = vpop.f32.mrf.mxu0
        %v1706 = vadd.f32 0.0, %v1705
        %v1707 = vpop.f32.mrf.mxu0
        %1708 = vmatprep.mubr.f32.mxu0 0.0
        %1709 = vmatmul.mubr.f32.gmra.mxu0 %v1521
        %v1710 = vpop.f32.mrf.mxu0
        %v1711 = vadd.f32 0.0, %v1710
        %v1712 = vpop.f32.mrf.mxu0
        %1713 = vmatprep.mubr.f32.mxu0 0.0
        %1714 = vmatmul.mubr.f32.gmra.mxu0 %v1524
        %v1715 = vpop.f32.mrf.mxu0
        %v1716 = vadd.f32 0.0, %v1715
        %v1717 = vpop.f32.mrf.mxu0
        %1718 = vmatprep.mubr.f32.mxu0 0.0
        %1719 = vmatmul.mubr.f32.gmra.mxu0 %v1527
        %v1720 = vpop.f32.mrf.mxu0
        %v1721 = vadd.f32 0.0, %v1720
        %v1722 = vpop.f32.mrf.mxu0
        %1723 = vmatprep.mubr.f32.mxu0 0.0
        %1724 = vmatmul.mubr.f32.gmra.mxu0 %v1530
        %v1725 = vpop.f32.mrf.mxu0
        %v1726 = vadd.f32 0.0, %v1725
        %v1727 = vpop.f32.mrf.mxu0
        %1728 = vmatprep.mubr.f32.mxu0 0.0
        %1729 = vmatmul.mubr.f32.gmra.mxu0 %v1533
        %v1730 = vpop.f32.mrf.mxu0
        %v1731 = vadd.f32 0.0, %v1730
        %v1732 = vpop.f32.mrf.mxu0
        %1733 = vmatprep.mubr.f32.mxu0 0.0
        %1734 = vmatmul.mubr.f32.gmra.mxu0 %v1536
        %v1735 = vpop.f32.mrf.mxu0
        %v1736 = vadd.f32 0.0, %v1735
        %v1737 = vpop.f32.mrf.mxu0
        %1738 = vmatprep.mubr.f32.mxu0 0.0
        %1739 = vmatmul.mubr.f32.gmra.mxu0 %v1539
        %v1740 = vpop.f32.mrf.mxu0
        %v1741 = vadd.f32 0.0, %v1740
        %v1742 = vpop.f32.mrf.mxu0
        %1743 = vmatprep.mubr.f32.mxu0 0.0
        %1744 = vmatmul.mubr.f32.gmra.mxu0 %v1542
        %v1745 = vpop.f32.mrf.mxu0
        %v1746 = vadd.f32 0.0, %v1745
        %v1747 = vpop.f32.mrf.mxu0
        %1748 = vmatprep.mubr.f32.mxu0 0.0
        %1749 = vmatmul.mubr.f32.gmra.mxu0 %v1545
        %v1750 = vpop.f32.mrf.mxu0
        %v1751 = vadd.f32 0.0, %v1750
        %v1752 = vpop.f32.mrf.mxu0
        %1753 = vmatprep.mubr.f32.mxu0 0.0
        %1754 = vmatmul.mubr.f32.gmra.mxu0 %v1548
        %v1755 = vpop.f32.mrf.mxu0
        %v1756 = vadd.f32 0.0, %v1755
        %v1757 = vpop.f32.mrf.mxu0
        %1758 = vmatprep.mubr.f32.mxu0 0.0
        %1759 = vmatmul.mubr.f32.gmra.mxu0 %v1551
        %v1760 = vpop.f32.mrf.mxu0
        %v1761 = vadd.f32 0.0, %v1760
        %v1762 = vpop.f32.mrf.mxu0
        %1763 = vmatprep.mubr.f32.mxu0 0.0
        %1764 = vmatmul.mubr.f32.gmra.mxu0 %v1554
        %v1765 = vpop.f32.mrf.mxu0
        %v1766 = vadd.f32 0.0, %v1765
        %v1767 = vpop.f32.mrf.mxu0
        %1768 = vmatprep.mubr.f32.mxu0 0.0
        %1769 = vmatmul.mubr.f32.gmra.mxu0 %v1557
        %v1770 = vpop.f32.mrf.mxu0
        %v1771 = vadd.f32 0.0, %v1770
        %v1772 = vpop.f32.mrf.mxu0
        %1773 = vmatprep.mubr.f32.mxu0 0.0
        %1774 = vmatmul.mubr.f32.gmra.mxu0 %v1560
        %v1775 = vpop.f32.mrf.mxu0
        %v1776 = vadd.f32 0.0, %v1775
        %v1777 = vpop.f32.mrf.mxu0
        %1778 = vmatprep.mubr.f32.mxu0 0.0
        %1779 = vmatmul.mubr.f32.gmra.mxu0 %v1563
        %v1780 = vpop.f32.mrf.mxu0
        %v1781 = vadd.f32 0.0, %v1780
        %v1782 = vpop.f32.mrf.mxu0
        %1783 = vmatprep.mubr.f32.mxu0 0.0
        %1784 = vmatmul.mubr.f32.gmra.mxu0 %v1566
        %v1785 = vpop.f32.mrf.mxu0
        %v1786 = vadd.f32 0.0, %v1785
        %v1787 = vpop.f32.mrf.mxu0
        %1788 = vmatprep.mubr.f32.mxu0 0.0
        %1789 = vmatmul.mubr.f32.gmra.mxu0 %v1569
        %v1790 = vpop.f32.mrf.mxu0
        %v1791 = vadd.f32 0.0, %v1790
        %v1792 = vpop.f32.mrf.mxu0
        %1793 = vmatprep.mubr.f32.mxu0 0.0
        %1794 = vmatmul.mubr.f32.gmra.mxu0 %v1572
        %v1795 = vpop.f32.mrf.mxu0
        %v1796 = vadd.f32 0.0, %v1795
        %v1797 = vpop.f32.mrf.mxu0
        %1798 = vmatprep.mubr.f32.mxu0 0.0
        %1799 = vmatmul.mubr.f32.gmra.mxu0 %v1575
        %v1800 = vpop.f32.mrf.mxu0
        %v1801 = vadd.f32 0.0, %v1800
        %v1802 = vpop.f32.mrf.mxu0
        %1803 = vdwg.mxu0
        %v1804 = vmax.f32 %v1646, %v1666
        %v1805 = vmax.f32 %v1651, %v1671
        %v1806 = vmax.f32 %v1656, %v1676
        %v1807 = vmax.f32 %v1661, %v1681
        %v1808 = vmax.f32 %v1804, %v1686
        %v1809 = vmax.f32 %v1805, %v1691
        %v1810 = vmax.f32 %v1806, %v1696
        %v1811 = vmax.f32 %v1807, %v1701
        %v1812 = vmax.f32 %v1808, %v1706
        %v1813 = vmax.f32 %v1809, %v1711
        %v1814 = vmax.f32 %v1810, %v1716
        %v1815 = vmax.f32 %v1811, %v1721
        %v1816 = vmax.f32 %v1812, %v1726
        %v1817 = vmax.f32 %v1813, %v1731
        %v1818 = vmax.f32 %v1814, %v1736
        %v1819 = vmax.f32 %v1815, %v1741
        %v1820 = vmax.f32 %v1816, %v1746
        %v1821 = vmax.f32 %v1817, %v1751
        %v1822 = vmax.f32 %v1818, %v1756
        %v1823 = vmax.f32 %v1819, %v1761
        %v1824 = vmax.f32 %v1820, %v1766
        %v1825 = vmax.f32 %v1821, %v1771
        %v1826 = vmax.f32 %v1822, %v1776
        %v1827 = vmax.f32 %v1823, %v1781
        %v1828 = vmax.f32 %v1824, %v1786
        %v1829 = vmax.f32 %v1825, %v1791
        %v1830 = vmax.f32 %v1826, %v1796
        %v1831 = vmax.f32 %v1827, %v1801
        %v1832 = vmax.f32 %v1828, %v1829
        %v1833 = vmax.f32 %v1830, %v1831
        %v1834 = vmax.f32 %v1832, %v1833
        %v1835 = vrot.slane %v1834, 4
        %v1836 = vmax.f32 %v1834, %v1835
        %v1837 = vrot.slane %v1836, 2
        %v1838 = vmax.f32 %v1836, %v1837
        %v1839 = vrot.slane %v1838, 1
        %v1840 = vmax.f32 %v1838, %v1839
        %v1841 = vsub.f32 %v1646, %v1840
        %v1842 = vsub.f32 %v1651, %v1840
        %v1843 = vsub.f32 %v1656, %v1840
        %v1844 = vsub.f32 %v1661, %v1840
        %v1845 = vsub.f32 %v1666, %v1840
        %v1846 = vsub.f32 %v1671, %v1840
        %v1847 = vsub.f32 %v1676, %v1840
        %v1848 = vsub.f32 %v1681, %v1840
        %v1849 = vsub.f32 %v1686, %v1840
        %v1850 = vsub.f32 %v1691, %v1840
        %v1851 = vsub.f32 %v1696, %v1840
        %v1852 = vsub.f32 %v1701, %v1840
        %v1853 = vsub.f32 %v1706, %v1840
        %v1854 = vsub.f32 %v1711, %v1840
        %v1855 = vsub.f32 %v1716, %v1840
        %v1856 = vsub.f32 %v1721, %v1840
        %v1857 = vsub.f32 %v1726, %v1840
        %v1858 = vsub.f32 %v1731, %v1840
        %v1859 = vsub.f32 %v1736, %v1840
        %v1860 = vsub.f32 %v1741, %v1840
        %v1861 = vsub.f32 %v1746, %v1840
        %v1862 = vsub.f32 %v1751, %v1840
        %v1863 = vsub.f32 %v1756, %v1840
        %v1864 = vsub.f32 %v1761, %v1840
        %v1865 = vsub.f32 %v1766, %v1840
        %v1866 = vsub.f32 %v1771, %v1840
        %v1867 = vsub.f32 %v1776, %v1840
        %v1868 = vsub.f32 %v1781, %v1840
        %v1869 = vsub.f32 %v1786, %v1840
        %v1870 = vsub.f32 %v1791, %v1840
        %v1871 = vsub.f32 %v1796, %v1840
        %v1872 = vsub.f32 %v1801, %v1840
        %v1873 = vmul.f32 %v1841, 1.442695
        %v1874 = vpow.pop %v1873
        %v1875 = vmul.f32 %v1842, 1.442695
        %v1876 = vpow.pop %v1875
        %v1877 = vmul.f32 %v1843, 1.442695
        %v1878 = vpow.pop %v1877
        %v1879 = vmul.f32 %v1844, 1.442695
        %v1880 = vpow.pop %v1879
        %v1881 = vmul.f32 %v1845, 1.442695
        %v1882 = vpow.pop %v1881
        %v1883 = vmul.f32 %v1846, 1.442695
        %v1884 = vpow.pop %v1883
        %v1885 = vmul.f32 %v1847, 1.442695
        %v1886 = vpow.pop %v1885
        %v1887 = vmul.f32 %v1848, 1.442695
        %v1888 = vpow.pop %v1887
        %v1889 = vmul.f32 %v1849, 1.442695
        %v1890 = vpow.pop %v1889
        %v1891 = vmul.f32 %v1850, 1.442695
        %v1892 = vpow.pop %v1891
        %v1893 = vmul.f32 %v1851, 1.442695
        %v1894 = vpow.pop %v1893
        %v1895 = vmul.f32 %v1852, 1.442695
        %v1896 = vpow.pop %v1895
        %v1897 = vmul.f32 %v1853, 1.442695
        %v1898 = vpow.pop %v1897
        %v1899 = vmul.f32 %v1854, 1.442695
        %v1900 = vpow.pop %v1899
        %v1901 = vmul.f32 %v1855, 1.442695
        %v1902 = vpow.pop %v1901
        %v1903 = vmul.f32 %v1856, 1.442695
        %v1904 = vpow.pop %v1903
        %v1905 = vmul.f32 %v1857, 1.442695
        %v1906 = vpow.pop %v1905
        %v1907 = vmul.f32 %v1858, 1.442695
        %v1908 = vpow.pop %v1907
        %v1909 = vmul.f32 %v1859, 1.442695
        %v1910 = vpow.pop %v1909
        %v1911 = vmul.f32 %v1860, 1.442695
        %v1912 = vpow.pop %v1911
        %v1913 = vmul.f32 %v1861, 1.442695
        %v1914 = vpow.pop %v1913
        %v1915 = vmul.f32 %v1862, 1.442695
        %v1916 = vpow.pop %v1915
        %v1917 = vmul.f32 %v1863, 1.442695
        %v1918 = vpow.pop %v1917
        %v1919 = vmul.f32 %v1864, 1.442695
        %v1920 = vpow.pop %v1919
        %v1921 = vmul.f32 %v1865, 1.442695
        %v1922 = vpow.pop %v1921
        %v1923 = vmul.f32 %v1866, 1.442695
        %v1924 = vpow.pop %v1923
        %v1925 = vmul.f32 %v1867, 1.442695
        %v1926 = vpow.pop %v1925
        %v1927 = vmul.f32 %v1868, 1.442695
        %v1928 = vpow.pop %v1927
        %v1929 = vmul.f32 %v1869, 1.442695
        %v1930 = vpow.pop %v1929
        %v1931 = vmul.f32 %v1870, 1.442695
        %v1932 = vpow.pop %v1931
        %v1933 = vmul.f32 %v1871, 1.442695
        %v1934 = vpow.pop %v1933
        %v1935 = vmul.f32 %v1872, 1.442695
        %v1936 = vpow.pop %v1935
        %v1937 = vpack.c.bf16 %v1876, %v1874
        %v1938 = vpack.c.bf16 %v1880, %v1878
        %v1939 = vpack.c.bf16 %v1884, %v1882
        %v1940 = vpack.c.bf16 %v1888, %v1886
        %v1941 = vpack.c.bf16 %v1892, %v1890
        %v1942 = vpack.c.bf16 %v1896, %v1894
        %v1943 = vpack.c.bf16 %v1900, %v1898
        %v1944 = vpack.c.bf16 %v1904, %v1902
        %v1945 = vpack.c.bf16 %v1908, %v1906
        %v1946 = vpack.c.bf16 %v1912, %v1910
        %v1947 = vpack.c.bf16 %v1916, %v1914
        %v1948 = vpack.c.bf16 %v1920, %v1918
        %v1949 = vpack.c.bf16 %v1924, %v1922
        %v1950 = vpack.c.bf16 %v1928, %v1926
        %v1951 = vpack.c.bf16 %v1932, %v1930
        %v1952 = vpack.c.bf16 %v1936, %v1934
        %1953 = vmatprep.subr.bf16.mxu0 0
        %1954 = vmatpush1.bf16.msra.mxu0 %v1944
        %1955 = vmatprep.subr.bf16.mxu0 0
        %1956 = vmatpush1.bf16.msra.mxu0 %v1943
        %1957 = vmatprep.subr.bf16.mxu0 0
        %1958 = vmatpush1.bf16.msra.mxu0 %v1942
        %1959 = vmatprep.subr.bf16.mxu0 0
        %1960 = vmatpush1.bf16.msra.mxu0 %v1941
        %1961 = vmatprep.subr.bf16.mxu0 0
        %1962 = vmatpush1.bf16.msra.mxu0 %v1940
        %1963 = vmatprep.subr.bf16.mxu0 0
        %1964 = vmatpush1.bf16.msra.mxu0 %v1939
        %1965 = vmatprep.subr.bf16.mxu0 0
        %1966 = vmatpush1.bf16.msra.mxu0 %v1938
        %1967 = vmatprep.subr.bf16.mxu0 0
        %1968 = vmatpush1.bf16.msra.mxu0 %v1937
        %1969 = vmatprep.subr.bf16.mxu0 0
        %1970 = vmatpush2.bf16.msra.mxu0 %v1952
        %1971 = vmatprep.subr.bf16.mxu0 0
        %1972 = vmatpush2.bf16.msra.mxu0 %v1951
        %1973 = vmatprep.subr.bf16.mxu0 0
        %1974 = vmatpush2.bf16.msra.mxu0 %v1950
        %1975 = vmatprep.subr.bf16.mxu0 0
        %1976 = vmatpush2.bf16.msra.mxu0 %v1949
        %1977 = vmatprep.subr.bf16.mxu0 0
        %1978 = vmatpush2.bf16.msra.mxu0 %v1948
        %1979 = vmatprep.subr.bf16.mxu0 0
        %1980 = vmatpush2.bf16.msra.mxu0 %v1947
        %1981 = vmatprep.subr.bf16.mxu0 0
        %1982 = vmatpush2.bf16.msra.mxu0 %v1946
        %1983 = vmatprep.subr.bf16.mxu0 0
        %1984 = vmatpush2.bf16.msra.mxu0 %v1945
        %1985 = vmatprep.mubr.bf16.mxu0 %v1416
        %1986 = vmatmul.mubr.bf16.gmra.mxu0 %v1415
        %v1987 = vpop.f32.mrf.mxu0
        %v1988 = vadd.f32 0.0, %v1987
        %v1989 = vpop.f32.mrf.mxu0
        %v1990 = vpop.f32.mrf.mxu0
        %v1991 = vpop.f32.mrf.mxu0
        %1992 = vdwg.mxu0
        %v1993 = vrcp.pop %v1988
        %v1994 = vlaneseq
        %v1995 = vshrl.u32 %v1994, 7
        %v1996 = vsub.s32 4, %v1995
        %v1997 = vrot.slane %v1993, %v1996
        %v1998 = vmul.f32 %v1988, %v1997
        %v1999 = vsel %vm237, %v1405, 0
        %2001 = vmatprep.subr.mxu0 0.0
        %2002 = vmatpush1.msra.mxu0 0.0
        %2003 = vmatprep.subr.mxu0 0.0
        %2004 = vmatpush1.msra.mxu0 0.0
        %2005 = vmatprep.subr.mxu0 0.0
        %2006 = vmatpush1.msra.mxu0 0.0
        %2007 = vmatprep.subr.mxu0 0.0
        %2008 = vmatpush1.msra.mxu0 0.0
        %2009 = vmatprep.subr.mxu0 0.0
        %2010 = vmatpush1.msra.mxu0 0.0
        %2011 = vmatprep.subr.mxu0 0.0
        %2012 = vmatpush1.msra.mxu0 0.0
        %2013 = vmatprep.subr.mxu0 0.0
        %2014 = vmatpush1.msra.mxu0 0.0
        %2015 = vmatprep.subr.mxu0 0.0
        %2016 = vmatpush1.msra.mxu0 0.0
        %2017 = vmatprep.subr.mxu0 0.0
        %2018 = vmatpush1.msra.mxu0 0.0
        %2019 = vmatprep.subr.mxu0 0.0
        %2020 = vmatpush1.msra.mxu0 0.0
        %2021 = vmatprep.subr.mxu0 0.0
        %2022 = vmatpush1.msra.mxu0 0.0
        %2023 = vmatprep.subr.mxu0 0.0
        %2024 = vmatpush1.msra.mxu0 0.0
        %2025 = vmatprep.subr.mxu0 0.0
        %2026 = vmatpush1.msra.mxu0 0.0
        %2027 = vmatprep.subr.mxu0 0.0
        %2028 = vmatpush1.msra.mxu0 0.0
        %2029 = vmatprep.subr.mxu0 0.0
        %2030 = vmatpush1.msra.mxu0 0.0
        %2031 = vmatprep.subr.mxu0 0.0
        %2032 = vmatpush1.msra.mxu0 %v1999
        %2033 = vmatprep.subr.mxu0 0.0
        %2034 = vmatpush2.msra.mxu0 0.0
        %2035 = vmatprep.subr.mxu0 0.0
        %2036 = vmatpush2.msra.mxu0 0.0
        %2037 = vmatprep.subr.mxu0 0.0
        %2038 = vmatpush2.msra.mxu0 0.0
        %2039 = vmatprep.subr.mxu0 0.0
        %2040 = vmatpush2.msra.mxu0 0.0
        %2041 = vmatprep.subr.mxu0 0.0
        %2042 = vmatpush2.msra.mxu0 0.0
        %2043 = vmatprep.subr.mxu0 0.0
        %2044 = vmatpush2.msra.mxu0 0.0
        %2045 = vmatprep.subr.mxu0 0.0
        %2046 = vmatpush2.msra.mxu0 0.0
        %2047 = vmatprep.subr.mxu0 0.0
        %2048 = vmatpush2.msra.mxu0 0.0
        %2049 = vmatprep.subr.mxu0 0.0
        %2050 = vmatpush2.msra.mxu0 0.0
        %2051 = vmatprep.subr.mxu0 0.0
        %2052 = vmatpush2.msra.mxu0 0.0
        %2053 = vmatprep.subr.mxu0 0.0
        %2054 = vmatpush2.msra.mxu0 0.0
        %2055 = vmatprep.subr.mxu0 0.0
        %2056 = vmatpush2.msra.mxu0 0.0
        %2057 = vmatprep.subr.mxu0 0.0
        %2058 = vmatpush2.msra.mxu0 0.0
        %2059 = vmatprep.subr.mxu0 0.0
        %2060 = vmatpush2.msra.mxu0 0.0
        %2061 = vmatprep.subr.mxu0 0.0
        %2062 = vmatpush2.msra.mxu0 0.0
        %2063 = vmatprep.subr.mxu0 0.0
        %2064 = vmatpush2.msra.mxu0 0.0
        %2065 = vmatprep.mubr.f32.mxu0 0.0
        %2066 = vmatmul.mubr.f32.gmra.mxu0 %v1482
        %v2067 = vpop.f32.mrf.mxu0
        %v2068 = vadd.f32 0.0, %v2067
        %v2069 = vpop.f32.mrf.mxu0
        %2070 = vmatprep.mubr.f32.mxu0 0.0
        %2071 = vmatmul.mubr.f32.gmra.mxu0 %v1485
        %v2072 = vpop.f32.mrf.mxu0
        %v2073 = vadd.f32 0.0, %v2072
        %v2074 = vpop.f32.mrf.mxu0
        %2075 = vmatprep.mubr.f32.mxu0 0.0
        %2076 = vmatmul.mubr.f32.gmra.mxu0 %v1488
        %v2077 = vpop.f32.mrf.mxu0
        %v2078 = vadd.f32 0.0, %v2077
        %v2079 = vpop.f32.mrf.mxu0
        %2080 = vmatprep.mubr.f32.mxu0 0.0
        %2081 = vmatmul.mubr.f32.gmra.mxu0 %v1491
        %v2082 = vpop.f32.mrf.mxu0
        %v2083 = vadd.f32 0.0, %v2082
        %v2084 = vpop.f32.mrf.mxu0
        %2085 = vmatprep.mubr.f32.mxu0 0.0
        %2086 = vmatmul.mubr.f32.gmra.mxu0 %v1494
        %v2087 = vpop.f32.mrf.mxu0
        %v2088 = vadd.f32 0.0, %v2087
        %v2089 = vpop.f32.mrf.mxu0
        %2090 = vmatprep.mubr.f32.mxu0 0.0
        %2091 = vmatmul.mubr.f32.gmra.mxu0 %v1497
        %v2092 = vpop.f32.mrf.mxu0
        %v2093 = vadd.f32 0.0, %v2092
        %v2094 = vpop.f32.mrf.mxu0
        %2095 = vmatprep.mubr.f32.mxu0 0.0
        %2096 = vmatmul.mubr.f32.gmra.mxu0 %v1500
        %v2097 = vpop.f32.mrf.mxu0
        %v2098 = vadd.f32 0.0, %v2097
        %v2099 = vpop.f32.mrf.mxu0
        %2100 = vmatprep.mubr.f32.mxu0 0.0
        %2101 = vmatmul.mubr.f32.gmra.mxu0 %v1503
        %v2102 = vpop.f32.mrf.mxu0
        %v2103 = vadd.f32 0.0, %v2102
        %v2104 = vpop.f32.mrf.mxu0
        %2105 = vmatprep.mubr.f32.mxu0 0.0
        %2106 = vmatmul.mubr.f32.gmra.mxu0 %v1506
        %v2107 = vpop.f32.mrf.mxu0
        %v2108 = vadd.f32 0.0, %v2107
        %v2109 = vpop.f32.mrf.mxu0
        %2110 = vmatprep.mubr.f32.mxu0 0.0
        %2111 = vmatmul.mubr.f32.gmra.mxu0 %v1509
        %v2112 = vpop.f32.mrf.mxu0
        %v2113 = vadd.f32 0.0, %v2112
        %v2114 = vpop.f32.mrf.mxu0
        %2115 = vmatprep.mubr.f32.mxu0 0.0
        %2116 = vmatmul.mubr.f32.gmra.mxu0 %v1512
        %v2117 = vpop.f32.mrf.mxu0
        %v2118 = vadd.f32 0.0, %v2117
        %v2119 = vpop.f32.mrf.mxu0
        %2120 = vmatprep.mubr.f32.mxu0 0.0
        %2121 = vmatmul.mubr.f32.gmra.mxu0 %v1515
        %v2122 = vpop.f32.mrf.mxu0
        %v2123 = vadd.f32 0.0, %v2122
        %v2124 = vpop.f32.mrf.mxu0
        %2125 = vmatprep.mubr.f32.mxu0 0.0
        %2126 = vmatmul.mubr.f32.gmra.mxu0 %v1518
        %v2127 = vpop.f32.mrf.mxu0
        %v2128 = vadd.f32 0.0, %v2127
        %v2129 = vpop.f32.mrf.mxu0
        %2130 = vmatprep.mubr.f32.mxu0 0.0
        %2131 = vmatmul.mubr.f32.gmra.mxu0 %v1521
        %v2132 = vpop.f32.mrf.mxu0
        %v2133 = vadd.f32 0.0, %v2132
        %v2134 = vpop.f32.mrf.mxu0
        %2135 = vmatprep.mubr.f32.mxu0 0.0
        %2136 = vmatmul.mubr.f32.gmra.mxu0 %v1524
        %v2137 = vpop.f32.mrf.mxu0
        %v2138 = vadd.f32 0.0, %v2137
        %v2139 = vpop.f32.mrf.mxu0
        %2140 = vmatprep.mubr.f32.mxu0 0.0
        %2141 = vmatmul.mubr.f32.gmra.mxu0 %v1527
        %v2142 = vpop.f32.mrf.mxu0
        %v2143 = vadd.f32 0.0, %v2142
        %v2144 = vpop.f32.mrf.mxu0
        %2145 = vmatprep.mubr.f32.mxu0 0.0
        %2146 = vmatmul.mubr.f32.gmra.mxu0 %v1530
        %v2147 = vpop.f32.mrf.mxu0
        %v2148 = vadd.f32 0.0, %v2147
        %v2149 = vpop.f32.mrf.mxu0
        %2150 = vmatprep.mubr.f32.mxu0 0.0
        %2151 = vmatmul.mubr.f32.gmra.mxu0 %v1533
        %v2152 = vpop.f32.mrf.mxu0
        %v2153 = vadd.f32 0.0, %v2152
        %v2154 = vpop.f32.mrf.mxu0
        %2155 = vmatprep.mubr.f32.mxu0 0.0
        %2156 = vmatmul.mubr.f32.gmra.mxu0 %v1536
        %v2157 = vpop.f32.mrf.mxu0
        %v2158 = vadd.f32 0.0, %v2157
        %v2159 = vpop.f32.mrf.mxu0
        %2160 = vmatprep.mubr.f32.mxu0 0.0
        %2161 = vmatmul.mubr.f32.gmra.mxu0 %v1539
        %v2162 = vpop.f32.mrf.mxu0
        %v2163 = vadd.f32 0.0, %v2162
        %v2164 = vpop.f32.mrf.mxu0
        %2165 = vmatprep.mubr.f32.mxu0 0.0
        %2166 = vmatmul.mubr.f32.gmra.mxu0 %v1542
        %v2167 = vpop.f32.mrf.mxu0
        %v2168 = vadd.f32 0.0, %v2167
        %v2169 = vpop.f32.mrf.mxu0
        %2170 = vmatprep.mubr.f32.mxu0 0.0
        %2171 = vmatmul.mubr.f32.gmra.mxu0 %v1545
        %v2172 = vpop.f32.mrf.mxu0
        %v2173 = vadd.f32 0.0, %v2172
        %v2174 = vpop.f32.mrf.mxu0
        %2175 = vmatprep.mubr.f32.mxu0 0.0
        %2176 = vmatmul.mubr.f32.gmra.mxu0 %v1548
        %v2177 = vpop.f32.mrf.mxu0
        %v2178 = vadd.f32 0.0, %v2177
        %v2179 = vpop.f32.mrf.mxu0
        %2180 = vmatprep.mubr.f32.mxu0 0.0
        %2181 = vmatmul.mubr.f32.gmra.mxu0 %v1551
        %v2182 = vpop.f32.mrf.mxu0
        %v2183 = vadd.f32 0.0, %v2182
        %v2184 = vpop.f32.mrf.mxu0
        %2185 = vmatprep.mubr.f32.mxu0 0.0
        %2186 = vmatmul.mubr.f32.gmra.mxu0 %v1554
        %v2187 = vpop.f32.mrf.mxu0
        %v2188 = vadd.f32 0.0, %v2187
        %v2189 = vpop.f32.mrf.mxu0
        %2190 = vmatprep.mubr.f32.mxu0 0.0
        %2191 = vmatmul.mubr.f32.gmra.mxu0 %v1557
        %v2192 = vpop.f32.mrf.mxu0
        %v2193 = vadd.f32 0.0, %v2192
        %v2194 = vpop.f32.mrf.mxu0
        %2195 = vmatprep.mubr.f32.mxu0 0.0
        %2196 = vmatmul.mubr.f32.gmra.mxu0 %v1560
        %v2197 = vpop.f32.mrf.mxu0
        %v2198 = vadd.f32 0.0, %v2197
        %v2199 = vpop.f32.mrf.mxu0
        %2200 = vmatprep.mubr.f32.mxu0 0.0
        %2201 = vmatmul.mubr.f32.gmra.mxu0 %v1563
        %v2202 = vpop.f32.mrf.mxu0
        %v2203 = vadd.f32 0.0, %v2202
        %v2204 = vpop.f32.mrf.mxu0
        %2205 = vmatprep.mubr.f32.mxu0 0.0
        %2206 = vmatmul.mubr.f32.gmra.mxu0 %v1566
        %v2207 = vpop.f32.mrf.mxu0
        %v2208 = vadd.f32 0.0, %v2207
        %v2209 = vpop.f32.mrf.mxu0
        %2210 = vmatprep.mubr.f32.mxu0 0.0
        %2211 = vmatmul.mubr.f32.gmra.mxu0 %v1569
        %v2212 = vpop.f32.mrf.mxu0
        %v2213 = vadd.f32 0.0, %v2212
        %v2214 = vpop.f32.mrf.mxu0
        %2215 = vmatprep.mubr.f32.mxu0 0.0
        %2216 = vmatmul.mubr.f32.gmra.mxu0 %v1572
        %v2217 = vpop.f32.mrf.mxu0
        %v2218 = vadd.f32 0.0, %v2217
        %v2219 = vpop.f32.mrf.mxu0
        %2220 = vmatprep.mubr.f32.mxu0 0.0
        %2221 = vmatmul.mubr.f32.gmra.mxu0 %v1575
        %v2222 = vpop.f32.mrf.mxu0
        %v2223 = vadd.f32 0.0, %v2222
        %v2224 = vpop.f32.mrf.mxu0
        %2225 = vdwg.mxu0
        %v2226 = vmax.f32 %v2068, %v2088
        %v2227 = vmax.f32 %v2073, %v2093
        %v2228 = vmax.f32 %v2078, %v2098
        %v2229 = vmax.f32 %v2083, %v2103
        %v2230 = vmax.f32 %v2226, %v2108
        %v2231 = vmax.f32 %v2227, %v2113
        %v2232 = vmax.f32 %v2228, %v2118
        %v2233 = vmax.f32 %v2229, %v2123
        %v2234 = vmax.f32 %v2230, %v2128
        %v2235 = vmax.f32 %v2231, %v2133
        %v2236 = vmax.f32 %v2232, %v2138
        %v2237 = vmax.f32 %v2233, %v2143
        %v2238 = vmax.f32 %v2234, %v2148
        %v2239 = vmax.f32 %v2235, %v2153
        %v2240 = vmax.f32 %v2236, %v2158
        %v2241 = vmax.f32 %v2237, %v2163
        %v2242 = vmax.f32 %v2238, %v2168
        %v2243 = vmax.f32 %v2239, %v2173
        %v2244 = vmax.f32 %v2240, %v2178
        %v2245 = vmax.f32 %v2241, %v2183
        %v2246 = vmax.f32 %v2242, %v2188
        %v2247 = vmax.f32 %v2243, %v2193
        %v2248 = vmax.f32 %v2244, %v2198
        %v2249 = vmax.f32 %v2245, %v2203
        %v2250 = vmax.f32 %v2246, %v2208
        %v2251 = vmax.f32 %v2247, %v2213
        %v2252 = vmax.f32 %v2248, %v2218
        %v2253 = vmax.f32 %v2249, %v2223
        %v2254 = vmax.f32 %v2250, %v2251
        %v2255 = vmax.f32 %v2252, %v2253
        %v2256 = vmax.f32 %v2254, %v2255
        %v2257 = vrot.slane %v2256, 4
        %v2258 = vmax.f32 %v2256, %v2257
        %v2259 = vrot.slane %v2258, 2
        %v2260 = vmax.f32 %v2258, %v2259
        %v2261 = vrot.slane %v2260, 1
        %v2262 = vmax.f32 %v2260, %v2261
        %v2263 = vsub.f32 %v2068, %v2262
        %v2264 = vsub.f32 %v2073, %v2262
        %v2265 = vsub.f32 %v2078, %v2262
        %v2266 = vsub.f32 %v2083, %v2262
        %v2267 = vsub.f32 %v2088, %v2262
        %v2268 = vsub.f32 %v2093, %v2262
        %v2269 = vsub.f32 %v2098, %v2262
        %v2270 = vsub.f32 %v2103, %v2262
        %v2271 = vsub.f32 %v2108, %v2262
        %v2272 = vsub.f32 %v2113, %v2262
        %v2273 = vsub.f32 %v2118, %v2262
        %v2274 = vsub.f32 %v2123, %v2262
        %v2275 = vsub.f32 %v2128, %v2262
        %v2276 = vsub.f32 %v2133, %v2262
        %v2277 = vsub.f32 %v2138, %v2262
        %v2278 = vsub.f32 %v2143, %v2262
        %v2279 = vsub.f32 %v2148, %v2262
        %v2280 = vsub.f32 %v2153, %v2262
        %v2281 = vsub.f32 %v2158, %v2262
        %v2282 = vsub.f32 %v2163, %v2262
        %v2283 = vsub.f32 %v2168, %v2262
        %v2284 = vsub.f32 %v2173, %v2262
        %v2285 = vsub.f32 %v2178, %v2262
        %v2286 = vsub.f32 %v2183, %v2262
        %v2287 = vsub.f32 %v2188, %v2262
        %v2288 = vsub.f32 %v2193, %v2262
        %v2289 = vsub.f32 %v2198, %v2262
        %v2290 = vsub.f32 %v2203, %v2262
        %v2291 = vsub.f32 %v2208, %v2262
        %v2292 = vsub.f32 %v2213, %v2262
        %v2293 = vsub.f32 %v2218, %v2262
        %v2294 = vsub.f32 %v2223, %v2262
        %v2295 = vmul.f32 %v2263, 1.442695
        %v2296 = vpow.pop %v2295
        %v2297 = vmul.f32 %v2264, 1.442695
        %v2298 = vpow.pop %v2297
        %v2299 = vmul.f32 %v2265, 1.442695
        %v2300 = vpow.pop %v2299
        %v2301 = vmul.f32 %v2266, 1.442695
        %v2302 = vpow.pop %v2301
        %v2303 = vmul.f32 %v2267, 1.442695
        %v2304 = vpow.pop %v2303
        %v2305 = vmul.f32 %v2268, 1.442695
        %v2306 = vpow.pop %v2305
        %v2307 = vmul.f32 %v2269, 1.442695
        %v2308 = vpow.pop %v2307
        %v2309 = vmul.f32 %v2270, 1.442695
        %v2310 = vpow.pop %v2309
        %v2311 = vmul.f32 %v2271, 1.442695
        %v2312 = vpow.pop %v2311
        %v2313 = vmul.f32 %v2272, 1.442695
        %v2314 = vpow.pop %v2313
        %v2315 = vmul.f32 %v2273, 1.442695
        %v2316 = vpow.pop %v2315
        %v2317 = vmul.f32 %v2274, 1.442695
        %v2318 = vpow.pop %v2317
        %v2319 = vmul.f32 %v2275, 1.442695
        %v2320 = vpow.pop %v2319
        %v2321 = vmul.f32 %v2276, 1.442695
        %v2322 = vpow.pop %v2321
        %v2323 = vmul.f32 %v2277, 1.442695
        %v2324 = vpow.pop %v2323
        %v2325 = vmul.f32 %v2278, 1.442695
        %v2326 = vpow.pop %v2325
        %v2327 = vmul.f32 %v2279, 1.442695
        %v2328 = vpow.pop %v2327
        %v2329 = vmul.f32 %v2280, 1.442695
        %v2330 = vpow.pop %v2329
        %v2331 = vmul.f32 %v2281, 1.442695
        %v2332 = vpow.pop %v2331
        %v2333 = vmul.f32 %v2282, 1.442695
        %v2334 = vpow.pop %v2333
        %v2335 = vmul.f32 %v2283, 1.442695
        %v2336 = vpow.pop %v2335
        %v2337 = vmul.f32 %v2284, 1.442695
        %v2338 = vpow.pop %v2337
        %v2339 = vmul.f32 %v2285, 1.442695
        %v2340 = vpow.pop %v2339
        %v2341 = vmul.f32 %v2286, 1.442695
        %v2342 = vpow.pop %v2341
        %v2343 = vmul.f32 %v2287, 1.442695
        %v2344 = vpow.pop %v2343
        %v2345 = vmul.f32 %v2288, 1.442695
        %v2346 = vpow.pop %v2345
        %v2347 = vmul.f32 %v2289, 1.442695
        %v2348 = vpow.pop %v2347
        %v2349 = vmul.f32 %v2290, 1.442695
        %v2350 = vpow.pop %v2349
        %v2351 = vmul.f32 %v2291, 1.442695
        %v2352 = vpow.pop %v2351
        %v2353 = vmul.f32 %v2292, 1.442695
        %v2354 = vpow.pop %v2353
        %v2355 = vmul.f32 %v2293, 1.442695
        %v2356 = vpow.pop %v2355
        %v2357 = vmul.f32 %v2294, 1.442695
        %v2358 = vpow.pop %v2357
        %v2359 = vpack.c.bf16 %v2298, %v2296
        %v2360 = vpack.c.bf16 %v2302, %v2300
        %v2361 = vpack.c.bf16 %v2306, %v2304
        %v2362 = vpack.c.bf16 %v2310, %v2308
        %v2363 = vpack.c.bf16 %v2314, %v2312
        %v2364 = vpack.c.bf16 %v2318, %v2316
        %v2365 = vpack.c.bf16 %v2322, %v2320
        %v2366 = vpack.c.bf16 %v2326, %v2324
        %v2367 = vpack.c.bf16 %v2330, %v2328
        %v2368 = vpack.c.bf16 %v2334, %v2332
        %v2369 = vpack.c.bf16 %v2338, %v2336
        %v2370 = vpack.c.bf16 %v2342, %v2340
        %v2371 = vpack.c.bf16 %v2346, %v2344
        %v2372 = vpack.c.bf16 %v2350, %v2348
        %v2373 = vpack.c.bf16 %v2354, %v2352
        %v2374 = vpack.c.bf16 %v2358, %v2356
        %2375 = vmatprep.subr.bf16.mxu0 0
        %2376 = vmatpush1.bf16.msra.mxu0 %v2366
        %2377 = vmatprep.subr.bf16.mxu0 0
        %2378 = vmatpush1.bf16.msra.mxu0 %v2365
        %2379 = vmatprep.subr.bf16.mxu0 0
        %2380 = vmatpush1.bf16.msra.mxu0 %v2364
        %2381 = vmatprep.subr.bf16.mxu0 0
        %2382 = vmatpush1.bf16.msra.mxu0 %v2363
        %2383 = vmatprep.subr.bf16.mxu0 0
        %2384 = vmatpush1.bf16.msra.mxu0 %v2362
        %2385 = vmatprep.subr.bf16.mxu0 0
        %2386 = vmatpush1.bf16.msra.mxu0 %v2361
        %2387 = vmatprep.subr.bf16.mxu0 0
        %2388 = vmatpush1.bf16.msra.mxu0 %v2360
        %2389 = vmatprep.subr.bf16.mxu0 0
        %2390 = vmatpush1.bf16.msra.mxu0 %v2359
        %2391 = vmatprep.subr.bf16.mxu0 0
        %2392 = vmatpush2.bf16.msra.mxu0 %v2374
        %2393 = vmatprep.subr.bf16.mxu0 0
        %2394 = vmatpush2.bf16.msra.mxu0 %v2373
        %2395 = vmatprep.subr.bf16.mxu0 0
        %2396 = vmatpush2.bf16.msra.mxu0 %v2372
        %2397 = vmatprep.subr.bf16.mxu0 0
        %2398 = vmatpush2.bf16.msra.mxu0 %v2371
        %2399 = vmatprep.subr.bf16.mxu0 0
        %2400 = vmatpush2.bf16.msra.mxu0 %v2370
        %2401 = vmatprep.subr.bf16.mxu0 0
        %2402 = vmatpush2.bf16.msra.mxu0 %v2369
        %2403 = vmatprep.subr.bf16.mxu0 0
        %2404 = vmatpush2.bf16.msra.mxu0 %v2368
        %2405 = vmatprep.subr.bf16.mxu0 0
        %2406 = vmatpush2.bf16.msra.mxu0 %v2367
        %2407 = vmatprep.mubr.bf16.mxu0 %v1416
        %2408 = vmatmul.mubr.bf16.gmra.mxu0 %v1415
        %v2409 = vpop.f32.mrf.mxu0
        %v2410 = vadd.f32 0.0, %v2409
        %v2411 = vpop.f32.mrf.mxu0
        %v2412 = vpop.f32.mrf.mxu0
        %v2413 = vpop.f32.mrf.mxu0
        %2414 = vdwg.mxu0
        %v2415 = vrcp.pop %v2410
        %v2416 = vlaneseq
        %v2417 = vshrl.u32 %v2416, 7
        %v2418 = vsub.s32 4, %v2417
        %v2419 = vrot.slane %v2415, %v2418
        %v2420 = vmul.f32 %v2410, %v2419
        %v2421 = vadd.f32 %v1998, %v1328
        %v2422 = vadd.f32 %v2420, %v1329
        %v2423 = vsel %vm237, %v2421, 0.0
        %v2424 = vrot.slane %v2423, 4
        %v2425 = vadd.f32 %v2423, %v2424
        %v2426 = vrot.slane %v2425, 2
        %v2427 = vadd.f32 %v2425, %v2426
        %v2428 = vrot.slane %v2427, 1
        %v2429 = vadd.f32 %v2427, %v2428
        %v2430 = vsel %vm237, %v2422, 0.0
        %v2431 = vrot.slane %v2430, 4
        %v2432 = vadd.f32 %v2430, %v2431
        %v2433 = vrot.slane %v2432, 2
        %v2434 = vadd.f32 %v2432, %v2433
        %v2435 = vrot.slane %v2434, 1
        %v2436 = vadd.f32 %v2434, %v2435
        %v2437 = vrcp.pop 4.0
        %v2438 = vmul.f32 %v2429, %v2437
        %v2439 = vmul.f32 %v2436, %v2437
        %v2440 = vld [vmem:[#allocation5] sm:$0xff]
        %v2441 = vld [vmem:[#allocation5 + $0x8] sm:$0xff]
        %v2442 = vld [vmem:[#allocation5 + $0x10] sm:$0x3]
        %v2443 = vld [vmem:[#allocation5 + $0x18] sm:$0x3]
        %v2444 = vld [vmem:[%s3] sm:$0x1]
        %2445 = vmatprep.subr.mxu0 0.0
        %2446 = vmatpush1.xpose.msra.mxu0 0.0
        %2447 = vmatprep.subr.mxu0 0.0
        %2448 = vmatpush1.xpose.msra.mxu0 0.0
        %2449 = vmatprep.subr.mxu0 0.0
        %2450 = vmatpush1.xpose.msra.mxu0 0.0
        %2451 = vmatprep.subr.mxu0 0.0
        %2452 = vmatpush1.xpose.msra.mxu0 0.0
        %2453 = vmatprep.subr.mxu0 0.0
        %2454 = vmatpush1.xpose.msra.mxu0 0.0
        %2455 = vmatprep.subr.mxu0 0.0
        %2456 = vmatpush1.xpose.msra.mxu0 0.0
        %2457 = vmatprep.subr.mxu0 0.0
        %2458 = vmatpush1.xpose.msra.mxu0 0.0
        %2459 = vmatprep.subr.mxu0 0.0
        %2460 = vmatpush1.xpose.msra.mxu0 0.0
        %2461 = vmatprep.subr.mxu0 0.0
        %2462 = vmatpush1.xpose.msra.mxu0 0.0
        %2463 = vmatprep.subr.mxu0 0.0
        %2464 = vmatpush1.xpose.msra.mxu0 0.0
        %2465 = vmatprep.subr.mxu0 0.0
        %2466 = vmatpush1.xpose.msra.mxu0 0.0
        %2467 = vmatprep.subr.mxu0 0.0
        %2468 = vmatpush1.xpose.msra.mxu0 0.0
        %2469 = vmatprep.subr.mxu0 0.0
        %2470 = vmatpush1.xpose.msra.mxu0 0.0
        %2471 = vmatprep.subr.mxu0 0.0
        %2472 = vmatpush1.xpose.msra.mxu0 0.0
        %2473 = vmatprep.subr.mxu0 %v2443
        %2474 = vmatpush1.xpose.msra.mxu0 %v2442
        %2475 = vmatprep.subr.mxu0 %v2441
        %2476 = vmatpush1.xpose.msra.mxu0 %v2440
        %2477 = vmatprep.subr.mxu0 0.0
        %2478 = vmatpush2.xpose.msra.mxu0 0.0
        %2479 = vmatprep.subr.mxu0 0.0
        %2480 = vmatpush2.xpose.msra.mxu0 0.0
        %2481 = vmatprep.subr.mxu0 0.0
        %2482 = vmatpush2.xpose.msra.mxu0 0.0
        %2483 = vmatprep.subr.mxu0 0.0
        %2484 = vmatpush2.xpose.msra.mxu0 0.0
        %2485 = vmatprep.subr.mxu0 0.0
        %2486 = vmatpush2.xpose.msra.mxu0 0.0
        %2487 = vmatprep.subr.mxu0 0.0
        %2488 = vmatpush2.xpose.msra.mxu0 0.0
        %2489 = vmatprep.subr.mxu0 0.0
        %2490 = vmatpush2.xpose.msra.mxu0 0.0
        %2491 = vmatprep.subr.mxu0 0.0
        %2492 = vmatpush2.xpose.msra.mxu0 0.0
        %2493 = vmatprep.subr.mxu0 0.0
        %2494 = vmatpush2.xpose.msra.mxu0 0.0
        %2495 = vmatprep.subr.mxu0 0.0
        %2496 = vmatpush2.xpose.msra.mxu0 0.0
        %2497 = vmatprep.subr.mxu0 0.0
        %2498 = vmatpush2.xpose.msra.mxu0 0.0
        %2499 = vmatprep.subr.mxu0 0.0
        %2500 = vmatpush2.xpose.msra.mxu0 0.0
        %2501 = vmatprep.subr.mxu0 0.0
        %2502 = vmatpush2.xpose.msra.mxu0 0.0
        %2503 = vmatprep.subr.mxu0 0.0
        %2504 = vmatpush2.xpose.msra.mxu0 0.0
        %2505 = vmatprep.subr.mxu0 0.0
        %2506 = vmatpush2.xpose.msra.mxu0 0.0
        %2507 = vmatprep.subr.mxu0 0.0
        %2508 = vmatpush2.xpose.msra.mxu0 0.0
        %2509 = vmatprep.mubr.f32.mxu0 %v2439
        %2510 = vmatmul.mubr.f32.gmra.mxu0 %v2438
        %v2511 = vpop.f32.mrf.mxu0
        %v2512 = vadd.f32 %v2444, %v2511
        %v2513 = vpop.f32.mrf.mxu0
        %2514 = vdwg.mxu0
        %vm2515 = vcmask 73728
        %2516 = vst.msk [vmem:[%s227] sm:$0x1] %vm2515, %v2512
        %s2517 = sand.u32 %s119, 1
        %s2518 = scalar_lea.sflag [#allocation4], %s2517
        %s2519 = sand.u32 %s119, 1
        %s2520 = scalar_lea.vmem [#allocation7], %s2519
        // Predicated region
        $region45: #{tpu_custom_call.1} parent=35 // pred_check
          %p2521 = pneg %p129
        $region46: #{tpu_custom_call.1} parent=35 // pred_check_branch
          %2523 = sbr.rel (%p2521) target = $region48
        $region47: #{tpu_custom_call.1} parent=35 // pred_region
          %s2525 = ssub.s32 16, 16
          %2526 = vsyncadd %s2518, %s2525
          %s2527 = smul.addr %s22, 16
          %s2528 = scalar_lea.hbm %s4, %s2527
          %s2530 = sshll.u32 %s2520, 4
          %s2531 = int_to_ptr.vmem [resolvable:$true] %s2530
          %2533 = dma.vmem_to_hbm [thread:$0]  %s2531, 16, %s2528, %s2518
        $region48: #{tpu_custom_call.1} parent=35 // pred_fallthru
          _
      $region36: #{tpu_custom_call.1} parent=5 // pred_fallthru
        _
      %p2534 = scmp.le.s32.totalorder 2, %s17
      // Predicated region
      $region49: #{tpu_custom_call.1} parent=5 // pred_check
        %p2535 = pneg %p2534
      $region50: #{tpu_custom_call.1} parent=5 // pred_check_branch
        %2537 = sbr.rel (%p2535) target = $region52
      $region51: #{tpu_custom_call.1} parent=5 // pred_region
        %s2538 = ssub.s32 %s17, 2
        // Predicated region
        $region53: #{tpu_custom_call.1} parent=51 // pred_check
          %p2539 = pneg %p135
        $region54: #{tpu_custom_call.1} parent=51 // pred_check_branch
          %2541 = sbr.rel (%p2539) target = $region56
        $region55: #{tpu_custom_call.1} parent=51 // pred_region
          %s2542 = sand.u32 %s120, 1
          %s2543 = scalar_lea.sflag [#allocation4], %s2542
          %s2544 = sand.u32 %s120, 1
          %s2545 = scalar_lea.vmem [#allocation7], %s2544
          %2546 = dma.done %s2543, 16
        $region56: #{tpu_custom_call.1} parent=51 // pred_fallthru
          _
      $region52: #{tpu_custom_call.1} parent=5 // pred_fallthru
        _
    $region6: #{tpu_custom_call.1} parent=1 // loop_footer
      %s21 = sadd.s32 1, %s17
    $region7: #{tpu_custom_call.1} parent=1 // loop_footer_branch
      %16 = sbr.rel target = $region3
    $region8: #{tpu_custom_call.1} parent=1 // loop_exit
      _
    %2547 = vsyncpa [#allocation3], 1
    %s2548 = scalar_lea.sflag [#allocation3], 1
    %2549 = vsyncpa %s2548, 1
    %2550 = vsyncpa [#allocation6], 1
    %2551 = vsyncpa [#allocation4], 1
    %s2552 = scalar_lea.sflag [#allocation4], 1
    %2553 = vsyncpa %s2552, 1

</llo_original>
